<compile_context>
chip_gen: v7x
topology: tpu7x:2x2x1
jax: 0.10.0
libtpu: 0.0.40
codegen_flags: <defaults>
</compile_context>

<pallas_src>
import math

import jax
import jax.numpy as jnp
from jax.experimental import pallas as pl
from jax.experimental.pallas import tpu as pltpu
from jax.scipy.linalg import block_diag

LN_EPS = 1e-5  # torch.nn.LayerNorm default


def _gelu_exact(h):
    # torch.nn.GELU() default: exact erf-based GELU
    return 0.5 * h * (1.0 + jax.lax.erf(h * jnp.float32(1.0 / math.sqrt(2.0))))


def fourier_kernel(x_ref, mproj_ref, w1c_ref, w1s_ref, w1x_ref, b1_ref,
                   g1_ref, bt1_ref, s_ref, w2_ref, b2_ref,
                   go_ref, bo_ln_ref, wo_ref, bo_ref, out_ref):
    f32 = jnp.float32
    bf16 = jnp.bfloat16
    H = wo_ref.shape[0]
    inv_h = jnp.float32(1.0 / H)

    x = x_ref[...].astype(f32)                               # [TN, K]

    # proj[n, k*F+f] = 2*pi * x[n, k] * dense[k, f] via a block-diagonal matrix.
    # Keep HIGHEST here (tiny K-wide contraction) so the trig sees f32-accurate
    # phases; everything downstream runs on bf16 MXU inputs.
    proj = jnp.dot(x, mproj_ref[...], preferred_element_type=f32,
                   precision=jax.lax.Precision.HIGHEST)      # [TN, K*F]
    cosf = jnp.cos(proj).astype(bf16)
    sinf = jnp.sin(proj).astype(bf16)

    # First Linear of all K per-input MLPs as lane-dense block-diagonal matmuls.
    h = (jnp.dot(cosf, w1c_ref[...], preferred_element_type=f32)
         + jnp.dot(sinf, w1s_ref[...], preferred_element_type=f32)
         + jnp.dot(x.astype(bf16), w1x_ref[...], preferred_element_type=f32)
         + b1_ref[...])                                      # [TN, K*H]

    # Per-k LayerNorm over each H-lane block. Block sums via a 0/1 block matrix
    # on the MXU keep the activation lane-dense (no lane<->sublane relayouts).
    mean = jnp.dot(h.astype(bf16), s_ref[...], preferred_element_type=f32) * inv_h
    d = h - mean
    var = jnp.dot((d * d).astype(bf16), s_ref[...], preferred_element_type=f32) * inv_h
    h = d * jax.lax.rsqrt(var + LN_EPS) * g1_ref[...] + bt1_ref[...]
    h = _gelu_exact(h)

    # Second Linear of each MLP fused with the sum over k: [TN, K*H] @ [K*H, H].
    acc = jnp.dot(h.astype(bf16), w2_ref[...], preferred_element_type=f32) + b2_ref[...]

    # Output head: LayerNorm(H) -> GELU -> Linear(H, H)   (f32 elementwise).
    mu = jnp.mean(acc, axis=-1, keepdims=True)
    v = jnp.mean((acc - mu) ** 2, axis=-1, keepdims=True)
    h2 = (acc - mu) * jax.lax.rsqrt(v + LN_EPS) * go_ref[...] + bo_ln_ref[...]
    h2 = _gelu_exact(h2)
    out = jnp.dot(h2.astype(bf16), wo_ref[...], preferred_element_type=f32) + bo_ref[...]
    out_ref[...] = out.astype(out_ref.dtype)


def _whole_spec(shape):
    ndim = len(shape)
    return pl.BlockSpec(shape, lambda i, _n=ndim: (0,) * _n)


def _round_up(a, b):
    return (a + b - 1) // b * b


def pack_params(p):
    """Pack the torch-layout params into lane-dense block matrices (wrapper-side, one-time)."""
    K, F = p["dense"].shape
    H = p["wo"].shape[-1]
    w1 = p["w1"]
    bf16 = jnp.bfloat16
    f32 = jnp.float32
    return {
        # [K, K*F]: row k holds 2*pi*dense[k] in its own block (block-diagonal).
        "m_proj": block_diag(*[(p["dense"][k:k + 1, :] * (2.0 * math.pi)) for k in range(K)]).astype(f32),
        # Block-diagonal first-layer weights: cos part, sin part, x-passthrough row.
        "w1c": block_diag(*[w1[k, :F, :] for k in range(K)]).astype(bf16),          # [K*F, K*H]
        "w1s": block_diag(*[w1[k, F:2 * F, :] for k in range(K)]).astype(bf16),     # [K*F, K*H]
        "w1x": block_diag(*[w1[k, 2 * F:2 * F + 1, :] for k in range(K)]).astype(bf16),  # [K, K*H]
        "b1": p["b1"].reshape(1, K * H).astype(f32),
        "g1": p["g1"].reshape(1, K * H).astype(f32),
        "bt1": p["bt1"].reshape(1, K * H).astype(f32),
        # 0/1 block-sum matrix for the per-k LayerNorm statistics.
        "s": jnp.kron(jnp.eye(K, dtype=f32), jnp.ones((H, H), f32)).astype(bf16),   # [K*H, K*H]
        # Second Linear fused with the sum over k: stack the K [H,H] blocks.
        "w2": p["w2"].reshape(K * H, H).astype(bf16),                                # [K*H, H]
        "b2": jnp.sum(p["b2"], axis=0, keepdims=True).astype(f32),                   # [1, H]
        "go": p["go"].astype(f32),
        "bo_ln": p["bo_ln"].astype(f32),
        "wo": p["wo"].astype(bf16),
        "bo": p["bo"].astype(f32),
    }


def fourier_embedding(x, params, *, tile_n=512):
    B, P, K = x.shape
    F = params["dense"].shape[-1]
    H = params["wo"].shape[-1]
    N = B * P

    packed = pack_params(params)
    names = ["m_proj", "w1c", "w1s", "w1x", "b1", "g1", "bt1",
             "s", "w2", "b2", "go", "bo_ln", "wo", "bo"]
    weights = [packed[n] for n in names]

    # Row tiling: big tiles (review: >=256; 512 is a multiple of 256 for
    # v6e/v7x and of 128 for v5e); pad N instead of constraining callers.
    tile = _round_up(min(tile_n, _round_up(N, 8)), 8)
    n_pad = _round_up(N, tile)

    x2 = x.reshape(N, K).astype(jnp.float32)
    if n_pad != N:
        x2 = jnp.pad(x2, ((0, n_pad - N), (0, 0)))

    KH = K * H
    flops_per_row = (2 * K * (K * F)                 # projection
                     + 2 * 2 * (K * F) * KH          # cos/sin first linear
                     + 2 * K * KH                    # x passthrough
                     + 2 * 2 * KH * KH               # LN block-sum matmuls
                     + 2 * KH * H                    # second linear (+ sum over k)
                     + 2 * H * H)                    # output linear
    cost = pl.CostEstimate(
        flops=int(n_pad * flops_per_row),
        transcendentals=int(n_pad * (2 * K * F + KH + H + K + 1)),
        bytes_accessed=int(4 * n_pad * (K + H)
                           + sum(int(w.size) * w.dtype.itemsize for w in weights)),
    )

    out = pl.pallas_call(
        fourier_kernel,
        out_shape=jax.ShapeDtypeStruct((n_pad, H), x.dtype),
        grid_spec=pltpu.PrefetchScalarGridSpec(
            num_scalar_prefetch=0,
            grid=(n_pad // tile,),
            in_specs=[pl.BlockSpec((tile, K), lambda i: (i, 0))]
                     + [_whole_spec(w.shape) for w in weights],
            out_specs=pl.BlockSpec((tile, H), lambda i: (i, 0)),
        ),
        compiler_params=pltpu.CompilerParams(dimension_semantics=("parallel",)),
        cost_estimate=cost,
    )(x2, *weights)
    return out[:N].reshape(B, P, H)


def fourier_embedding_ref(x, p):
    """Pure-JAX reference mirroring the PyTorch forward exactly."""
    proj = jnp.einsum("ijk,kl->ijkl", x, p["dense"]) * 2.0 * math.pi
    feat = jnp.concatenate([jnp.cos(proj), jnp.sin(proj), x[..., None]], axis=-1)
    K = x.shape[-1]
    acc = 0.0
    for k in range(K):
        h = feat[:, :, k] @ p["w1"][k] + p["b1"][k]
        mu = jnp.mean(h, -1, keepdims=True)
        var = jnp.mean((h - mu) ** 2, -1, keepdims=True)
        h = (h - mu) / jnp.sqrt(var + LN_EPS) * p["g1"][k] + p["bt1"][k]
        h = jax.nn.gelu(h, approximate=False)
        h = h @ p["w2"][k] + p["b2"][k]
        acc = acc + h
    mu = jnp.mean(acc, -1, keepdims=True)
    var = jnp.mean((acc - mu) ** 2, -1, keepdims=True)
    h = (acc - mu) / jnp.sqrt(var + LN_EPS) * p["go"][0] + p["bo_ln"][0]
    h = jax.nn.gelu(h, approximate=False)
    return h @ p["wo"] + p["bo"][0]


def init_params(key, input_size, hidden_size, freq_bands):
    ks = jax.random.split(key, 8)
    fin = freq_bands * 2 + 1
    s1 = 1.0 / math.sqrt(fin)
    s2 = 1.0 / math.sqrt(hidden_size)
    return {
        # dense: nn.Parameter(torch.randn(input_size, freq_bands))
        "dense": jax.random.normal(ks[0], (input_size, freq_bands), jnp.float32),
        # per-input-size MLP: Linear(2F+1, H) -> LayerNorm(H) -> GELU -> Linear(H, H)
        "w1": jax.random.normal(ks[1], (input_size, fin, hidden_size), jnp.float32) * s1,
        "b1": jax.random.normal(ks[2], (input_size, hidden_size), jnp.float32) * s1,
        "g1": jnp.ones((input_size, hidden_size), jnp.float32),
        "bt1": jnp.zeros((input_size, hidden_size), jnp.float32),
        "w2": jax.random.normal(ks[3], (input_size, hidden_size, hidden_size), jnp.float32) * s2,
        "b2": jax.random.normal(ks[4], (input_size, hidden_size), jnp.float32) * s2,
        # out: LayerNorm(H) -> GELU -> Linear(H, H)
        "go": jnp.ones((1, hidden_size), jnp.float32),
        "bo_ln": jnp.zeros((1, hidden_size), jnp.float32),
        "wo": jax.random.normal(ks[5], (hidden_size, hidden_size), jnp.float32) * s2,
        "bo": jax.random.normal(ks[6], (1, hidden_size), jnp.float32) * s2,
    }


if __name__ == "__main__":
    B, P = 2, 10           # batch, polygons (N=20 also exercises row padding)
    INPUT_SIZE = 4         # input_size
    FREQ_BANDS = 8         # freq_bands
    HIDDEN = 32            # hidden_size

    key = jax.random.PRNGKey(0)
    k_x, k_p = jax.random.split(key)
    x = jax.random.normal(k_x, (B, P, INPUT_SIZE), jnp.float32)
    params = init_params(k_p, INPUT_SIZE, HIDDEN, FREQ_BANDS)

    out = fourier_embedding(x, params, tile_n=512)
    out = jax.block_until_ready(out)

    ref = fourier_embedding_ref(x, params)
    assert out.shape == (B, P, HIDDEN)
    # Tolerance sized for bf16 MXU inputs (per perf guidance) vs the f32 reference.
    assert jnp.allclose(out, ref, rtol=2e-2, atol=2e-2), (
        f"max abs err {jnp.max(jnp.abs(out - ref))}")

    print("KERNEL_OK")
</pallas_src>

<mosaic_0001>
module attributes {stable_mosaic.version = 11 : i64} {
  func.func @fourier_kernel(%arg0: i32, %arg1: memref<24x4xf32, #tpu.memory_space<vmem>>, %arg2: memref<4x32xf32, #tpu.memory_space<vmem>>, %arg3: memref<32x128xbf16, #tpu.memory_space<vmem>>, %arg4: memref<32x128xbf16, #tpu.memory_space<vmem>>, %arg5: memref<4x128xbf16, #tpu.memory_space<vmem>>, %arg6: memref<1x128xf32, #tpu.memory_space<vmem>>, %arg7: memref<1x128xf32, #tpu.memory_space<vmem>>, %arg8: memref<1x128xf32, #tpu.memory_space<vmem>>, %arg9: memref<128x128xbf16, #tpu.memory_space<vmem>>, %arg10: memref<128x32xbf16, #tpu.memory_space<vmem>>, %arg11: memref<1x32xf32, #tpu.memory_space<vmem>>, %arg12: memref<1x32xf32, #tpu.memory_space<vmem>>, %arg13: memref<1x32xf32, #tpu.memory_space<vmem>>, %arg14: memref<32x32xbf16, #tpu.memory_space<vmem>>, %arg15: memref<1x32xf32, #tpu.memory_space<vmem>>, %arg16: memref<24x32xf32, #tpu.memory_space<vmem>>) attributes {dimension_semantics = [#tpu.dimension_semantics<parallel>], iteration_bounds = array<i64: 1>, scalar_prefetch = 0 : i64, scratch_operands = 0 : i64, tpu.core_type = #tpu.core_type<tc>, window_params = [{transform_indices = @transform_0, window_bounds = array<i64: 24, 4>}, {pipeline_mode = #tpu.pipeline_mode<synchronous>, transform_indices = @transform_1, window_bounds = array<i64: 4, 32>}, {pipeline_mode = #tpu.pipeline_mode<synchronous>, transform_indices = @transform_2, window_bounds = array<i64: 32, 128>}, {pipeline_mode = #tpu.pipeline_mode<synchronous>, transform_indices = @transform_3, window_bounds = array<i64: 32, 128>}, {pipeline_mode = #tpu.pipeline_mode<synchronous>, transform_indices = @transform_4, window_bounds = array<i64: 4, 128>}, {pipeline_mode = #tpu.pipeline_mode<synchronous>, transform_indices = @transform_5, window_bounds = array<i64: 1, 128>}, {pipeline_mode = #tpu.pipeline_mode<synchronous>, transform_indices = @transform_6, window_bounds = array<i64: 1, 128>}, {pipeline_mode = #tpu.pipeline_mode<synchronous>, transform_indices = @transform_7, window_bounds = array<i64: 1, 128>}, {pipeline_mode = #tpu.pipeline_mode<synchronous>, transform_indices = @transform_8, window_bounds = array<i64: 128, 128>}, {pipeline_mode = #tpu.pipeline_mode<synchronous>, transform_indices = @transform_9, window_bounds = array<i64: 128, 32>}, {pipeline_mode = #tpu.pipeline_mode<synchronous>, transform_indices = @transform_10, window_bounds = array<i64: 1, 32>}, {pipeline_mode = #tpu.pipeline_mode<synchronous>, transform_indices = @transform_11, window_bounds = array<i64: 1, 32>}, {pipeline_mode = #tpu.pipeline_mode<synchronous>, transform_indices = @transform_12, window_bounds = array<i64: 1, 32>}, {pipeline_mode = #tpu.pipeline_mode<synchronous>, transform_indices = @transform_13, window_bounds = array<i64: 32, 32>}, {pipeline_mode = #tpu.pipeline_mode<synchronous>, transform_indices = @transform_14, window_bounds = array<i64: 1, 32>}, {transform_indices = @transform_15, window_bounds = array<i64: 24, 32>}]} {
    %c0 = arith.constant 0 : index
    %c0_0 = arith.constant 0 : index
    %0 = vector.load %arg1[%c0, %c0_0] : memref<24x4xf32, #tpu.memory_space<vmem>>, vector<24x4xf32>
    %c0_1 = arith.constant 0 : index
    %c0_2 = arith.constant 0 : index
    %1 = vector.load %arg2[%c0_1, %c0_2] : memref<4x32xf32, #tpu.memory_space<vmem>>, vector<4x32xf32>
    %cst = arith.constant dense<0.000000e+00> : vector<24x32xf32>
    %2 = tpu.matmul %0, %1, %cst {dimension_numbers = #tpu.dot_dimension_numbers<[1], [0], [0], [1], [0, 0, 1, 1], [], []>, precision = #tpu.contract_precision<fp32>} : vector<24x4xf32>, vector<4x32xf32>, vector<24x32xf32> -> vector<24x32xf32>
    %3 = math.cos %2 : vector<24x32xf32>
    %4 = arith.truncf %3 : vector<24x32xf32> to vector<24x32xbf16>
    %5 = math.sin %2 : vector<24x32xf32>
    %6 = arith.truncf %5 : vector<24x32xf32> to vector<24x32xbf16>
    %c0_3 = arith.constant 0 : index
    %c0_4 = arith.constant 0 : index
    %7 = vector.load %arg3[%c0_3, %c0_4] : memref<32x128xbf16, #tpu.memory_space<vmem>>, vector<32x128xbf16>
    %cst_5 = arith.constant dense<0.000000e+00> : vector<24x128xf32>
    %8 = tpu.matmul %4, %7, %cst_5 {dimension_numbers = #tpu.dot_dimension_numbers<[1], [0], [0], [1], [0, 0, 1, 1], [], []>} : vector<24x32xbf16>, vector<32x128xbf16>, vector<24x128xf32> -> vector<24x128xf32>
    %c0_6 = arith.constant 0 : index
    %c0_7 = arith.constant 0 : index
    %9 = vector.load %arg4[%c0_6, %c0_7] : memref<32x128xbf16, #tpu.memory_space<vmem>>, vector<32x128xbf16>
    %cst_8 = arith.constant dense<0.000000e+00> : vector<24x128xf32>
    %10 = tpu.matmul %6, %9, %cst_8 {dimension_numbers = #tpu.dot_dimension_numbers<[1], [0], [0], [1], [0, 0, 1, 1], [], []>} : vector<24x32xbf16>, vector<32x128xbf16>, vector<24x128xf32> -> vector<24x128xf32>
    %11 = arith.addf %8, %10 : vector<24x128xf32>
    %12 = arith.truncf %0 : vector<24x4xf32> to vector<24x4xbf16>
    %c0_9 = arith.constant 0 : index
    %c0_10 = arith.constant 0 : index
    %13 = vector.load %arg5[%c0_9, %c0_10] : memref<4x128xbf16, #tpu.memory_space<vmem>>, vector<4x128xbf16>
    %cst_11 = arith.constant dense<0.000000e+00> : vector<24x128xf32>
    %14 = tpu.matmul %12, %13, %cst_11 {dimension_numbers = #tpu.dot_dimension_numbers<[1], [0], [0], [1], [0, 0, 1, 1], [], []>} : vector<24x4xbf16>, vector<4x128xbf16>, vector<24x128xf32> -> vector<24x128xf32>
    %15 = arith.addf %11, %14 : vector<24x128xf32>
    %c0_12 = arith.constant 0 : index
    %c0_13 = arith.constant 0 : index
    %16 = vector.load %arg6[%c0_12, %c0_13] : memref<1x128xf32, #tpu.memory_space<vmem>>, vector<1x128xf32>
    %17 = vector.broadcast %16 : vector<1x128xf32> to vector<24x128xf32>
    %18 = arith.addf %15, %17 : vector<24x128xf32>
    %19 = arith.truncf %18 : vector<24x128xf32> to vector<24x128xbf16>
    %c0_14 = arith.constant 0 : index
    %c0_15 = arith.constant 0 : index
    %20 = vector.load %arg9[%c0_14, %c0_15] : memref<128x128xbf16, #tpu.memory_space<vmem>>, vector<128x128xbf16>
    %cst_16 = arith.constant dense<0.000000e+00> : vector<24x128xf32>
    %21 = tpu.matmul %19, %20, %cst_16 {dimension_numbers = #tpu.dot_dimension_numbers<[1], [0], [0], [1], [0, 0, 1, 1], [], []>} : vector<24x128xbf16>, vector<128x128xbf16>, vector<24x128xf32> -> vector<24x128xf32>
    %cst_17 = arith.constant 3.125000e-02 : f32
    %22 = vector.broadcast %cst_17 : f32 to vector<24x128xf32>
    %23 = arith.mulf %21, %22 : vector<24x128xf32>
    %24 = arith.subf %18, %23 : vector<24x128xf32>
    %25 = arith.mulf %24, %24 : vector<24x128xf32>
    %26 = arith.truncf %25 : vector<24x128xf32> to vector<24x128xbf16>
    %c0_18 = arith.constant 0 : index
    %c0_19 = arith.constant 0 : index
    %27 = vector.load %arg9[%c0_18, %c0_19] : memref<128x128xbf16, #tpu.memory_space<vmem>>, vector<128x128xbf16>
    %cst_20 = arith.constant dense<0.000000e+00> : vector<24x128xf32>
    %28 = tpu.matmul %26, %27, %cst_20 {dimension_numbers = #tpu.dot_dimension_numbers<[1], [0], [0], [1], [0, 0, 1, 1], [], []>} : vector<24x128xbf16>, vector<128x128xbf16>, vector<24x128xf32> -> vector<24x128xf32>
    %cst_21 = arith.constant 3.125000e-02 : f32
    %29 = vector.broadcast %cst_21 : f32 to vector<24x128xf32>
    %30 = arith.mulf %28, %29 : vector<24x128xf32>
    %cst_22 = arith.constant 9.99999974E-6 : f32
    %31 = vector.broadcast %cst_22 : f32 to vector<24x128xf32>
    %32 = arith.addf %30, %31 : vector<24x128xf32>
    %33 = math.rsqrt %32 : vector<24x128xf32>
    %34 = arith.mulf %24, %33 : vector<24x128xf32>
    %c0_23 = arith.constant 0 : index
    %c0_24 = arith.constant 0 : index
    %35 = vector.load %arg7[%c0_23, %c0_24] : memref<1x128xf32, #tpu.memory_space<vmem>>, vector<1x128xf32>
    %36 = vector.broadcast %35 : vector<1x128xf32> to vector<24x128xf32>
    %37 = arith.mulf %34, %36 : vector<24x128xf32>
    %c0_25 = arith.constant 0 : index
    %c0_26 = arith.constant 0 : index
    %38 = vector.load %arg8[%c0_25, %c0_26] : memref<1x128xf32, #tpu.memory_space<vmem>>, vector<1x128xf32>
    %39 = vector.broadcast %38 : vector<1x128xf32> to vector<24x128xf32>
    %40 = arith.addf %37, %39 : vector<24x128xf32>
    %cst_27 = arith.constant 5.000000e-01 : f32
    %41 = vector.broadcast %cst_27 : f32 to vector<24x128xf32>
    %42 = arith.mulf %41, %40 : vector<24x128xf32>
    %cst_28 = arith.constant 0.707106769 : f32
    %43 = vector.broadcast %cst_28 : f32 to vector<24x128xf32>
    %44 = arith.mulf %40, %43 : vector<24x128xf32>
    %45 = math.erf %44 : vector<24x128xf32>
    %cst_29 = arith.constant 1.000000e+00 : f32
    %46 = vector.broadcast %cst_29 : f32 to vector<24x128xf32>
    %47 = arith.addf %46, %45 : vector<24x128xf32>
    %48 = arith.mulf %42, %47 : vector<24x128xf32>
    %49 = arith.truncf %48 : vector<24x128xf32> to vector<24x128xbf16>
    %c0_30 = arith.constant 0 : index
    %c0_31 = arith.constant 0 : index
    %50 = vector.load %arg10[%c0_30, %c0_31] : memref<128x32xbf16, #tpu.memory_space<vmem>>, vector<128x32xbf16>
    %cst_32 = arith.constant dense<0.000000e+00> : vector<24x32xf32>
    %51 = tpu.matmul %49, %50, %cst_32 {dimension_numbers = #tpu.dot_dimension_numbers<[1], [0], [0], [1], [0, 0, 1, 1], [], []>} : vector<24x128xbf16>, vector<128x32xbf16>, vector<24x32xf32> -> vector<24x32xf32>
    %c0_33 = arith.constant 0 : index
    %c0_34 = arith.constant 0 : index
    %52 = vector.load %arg11[%c0_33, %c0_34] : memref<1x32xf32, #tpu.memory_space<vmem>>, vector<1x32xf32>
    %53 = vector.broadcast %52 : vector<1x32xf32> to vector<24x32xf32>
    %54 = arith.addf %51, %53 : vector<24x32xf32>
    %cst_35 = arith.constant dense<0.000000e+00> : vector<24xf32>
    %55 = vector.multi_reduction <add>, %54, %cst_35 [1] : vector<24x32xf32> to vector<24xf32>
    %56 = vector.shape_cast %55 : vector<24xf32> to vector<24x1xf32>
    %cst_36 = arith.constant 3.200000e+01 : f32
    %57 = vector.broadcast %cst_36 : f32 to vector<24x1xf32>
    %58 = arith.divf %56, %57 : vector<24x1xf32>
    %59 = vector.broadcast %58 : vector<24x1xf32> to vector<24x32xf32>
    %60 = arith.subf %54, %59 : vector<24x32xf32>
    %61 = arith.mulf %60, %60 : vector<24x32xf32>
    %cst_37 = arith.constant dense<0.000000e+00> : vector<24xf32>
    %62 = vector.multi_reduction <add>, %61, %cst_37 [1] : vector<24x32xf32> to vector<24xf32>
    %63 = vector.shape_cast %62 : vector<24xf32> to vector<24x1xf32>
    %cst_38 = arith.constant 3.200000e+01 : f32
    %64 = vector.broadcast %cst_38 : f32 to vector<24x1xf32>
    %65 = arith.divf %63, %64 : vector<24x1xf32>
    %66 = vector.broadcast %58 : vector<24x1xf32> to vector<24x32xf32>
    %67 = arith.subf %54, %66 : vector<24x32xf32>
    %cst_39 = arith.constant 9.99999974E-6 : f32
    %68 = vector.broadcast %cst_39 : f32 to vector<24x1xf32>
    %69 = arith.addf %65, %68 : vector<24x1xf32>
    %70 = math.rsqrt %69 : vector<24x1xf32>
    %71 = vector.broadcast %70 : vector<24x1xf32> to vector<24x32xf32>
    %72 = arith.mulf %67, %71 : vector<24x32xf32>
    %c0_40 = arith.constant 0 : index
    %c0_41 = arith.constant 0 : index
    %73 = vector.load %arg12[%c0_40, %c0_41] : memref<1x32xf32, #tpu.memory_space<vmem>>, vector<1x32xf32>
    %74 = vector.broadcast %73 : vector<1x32xf32> to vector<24x32xf32>
    %75 = arith.mulf %72, %74 : vector<24x32xf32>
    %c0_42 = arith.constant 0 : index
    %c0_43 = arith.constant 0 : index
    %76 = vector.load %arg13[%c0_42, %c0_43] : memref<1x32xf32, #tpu.memory_space<vmem>>, vector<1x32xf32>
    %77 = vector.broadcast %76 : vector<1x32xf32> to vector<24x32xf32>
    %78 = arith.addf %75, %77 : vector<24x32xf32>
    %cst_44 = arith.constant 5.000000e-01 : f32
    %79 = vector.broadcast %cst_44 : f32 to vector<24x32xf32>
    %80 = arith.mulf %79, %78 : vector<24x32xf32>
    %cst_45 = arith.constant 0.707106769 : f32
    %81 = vector.broadcast %cst_45 : f32 to vector<24x32xf32>
    %82 = arith.mulf %78, %81 : vector<24x32xf32>
    %83 = math.erf %82 : vector<24x32xf32>
    %cst_46 = arith.constant 1.000000e+00 : f32
    %84 = vector.broadcast %cst_46 : f32 to vector<24x32xf32>
    %85 = arith.addf %84, %83 : vector<24x32xf32>
    %86 = arith.mulf %80, %85 : vector<24x32xf32>
    %87 = arith.truncf %86 : vector<24x32xf32> to vector<24x32xbf16>
    %c0_47 = arith.constant 0 : index
    %c0_48 = arith.constant 0 : index
    %88 = vector.load %arg14[%c0_47, %c0_48] : memref<32x32xbf16, #tpu.memory_space<vmem>>, vector<32x32xbf16>
    %cst_49 = arith.constant dense<0.000000e+00> : vector<24x32xf32>
    %89 = tpu.matmul %87, %88, %cst_49 {dimension_numbers = #tpu.dot_dimension_numbers<[1], [0], [0], [1], [0, 0, 1, 1], [], []>} : vector<24x32xbf16>, vector<32x32xbf16>, vector<24x32xf32> -> vector<24x32xf32>
    %c0_50 = arith.constant 0 : index
    %c0_51 = arith.constant 0 : index
    %90 = vector.load %arg15[%c0_50, %c0_51] : memref<1x32xf32, #tpu.memory_space<vmem>>, vector<1x32xf32>
    %91 = vector.broadcast %90 : vector<1x32xf32> to vector<24x32xf32>
    %92 = arith.addf %89, %91 : vector<24x32xf32>
    %c0_52 = arith.constant 0 : index
    %c0_53 = arith.constant 0 : index
    %93 = vector.load %arg16[%c0_52, %c0_53] : memref<24x32xf32, #tpu.memory_space<vmem>>, vector<24x32xf32>
    tpu.vector_store %arg16[%c0_52, %c0_53], %92 {strides = array<i32>} : memref<24x32xf32, #tpu.memory_space<vmem>>, vector<24x32xf32>,
    return
  }
  func.func @transform_0(%arg0: i32) -> (i32, i32) {
    %c0_i32 = arith.constant 0 : i32
    %c0_i32_0 = arith.constant 0 : i32
    return %arg0, %c0_i32 : i32, i32
  }
  func.func @transform_1(%arg0: i32) -> (i32, i32) {
    %c0_i32 = arith.constant 0 : i32
    %c0_i32_0 = arith.constant 0 : i32
    %c0_i32_1 = arith.constant 0 : i32
    return %c0_i32, %c0_i32_0 : i32, i32
  }
  func.func @transform_2(%arg0: i32) -> (i32, i32) {
    %c0_i32 = arith.constant 0 : i32
    %c0_i32_0 = arith.constant 0 : i32
    %c0_i32_1 = arith.constant 0 : i32
    return %c0_i32, %c0_i32_0 : i32, i32
  }
  func.func @transform_3(%arg0: i32) -> (i32, i32) {
    %c0_i32 = arith.constant 0 : i32
    %c0_i32_0 = arith.constant 0 : i32
    %c0_i32_1 = arith.constant 0 : i32
    return %c0_i32, %c0_i32_0 : i32, i32
  }
  func.func @transform_4(%arg0: i32) -> (i32, i32) {
    %c0_i32 = arith.constant 0 : i32
    %c0_i32_0 = arith.constant 0 : i32
    %c0_i32_1 = arith.constant 0 : i32
    return %c0_i32, %c0_i32_0 : i32, i32
  }
  func.func @transform_5(%arg0: i32) -> (i32, i32) {
    %c0_i32 = arith.constant 0 : i32
    %c0_i32_0 = arith.constant 0 : i32
    %c0_i32_1 = arith.constant 0 : i32
    return %c0_i32, %c0_i32_0 : i32, i32
  }
  func.func @transform_6(%arg0: i32) -> (i32, i32) {
    %c0_i32 = arith.constant 0 : i32
    %c0_i32_0 = arith.constant 0 : i32
    %c0_i32_1 = arith.constant 0 : i32
    return %c0_i32, %c0_i32_0 : i32, i32
  }
  func.func @transform_7(%arg0: i32) -> (i32, i32) {
    %c0_i32 = arith.constant 0 : i32
    %c0_i32_0 = arith.constant 0 : i32
    %c0_i32_1 = arith.constant 0 : i32
    return %c0_i32, %c0_i32_0 : i32, i32
  }
  func.func @transform_8(%arg0: i32) -> (i32, i32) {
    %c0_i32 = arith.constant 0 : i32
    %c0_i32_0 = arith.constant 0 : i32
    %c0_i32_1 = arith.constant 0 : i32
    return %c0_i32, %c0_i32_0 : i32, i32
  }
  func.func @transform_9(%arg0: i32) -> (i32, i32) {
    %c0_i32 = arith.constant 0 : i32
    %c0_i32_0 = arith.constant 0 : i32
    %c0_i32_1 = arith.constant 0 : i32
    return %c0_i32, %c0_i32_0 : i32, i32
  }
  func.func @transform_10(%arg0: i32) -> (i32, i32) {
    %c0_i32 = arith.constant 0 : i32
    %c0_i32_0 = arith.constant 0 : i32
    %c0_i32_1 = arith.constant 0 : i32
    return %c0_i32, %c0_i32_0 : i32, i32
  }
  func.func @transform_11(%arg0: i32) -> (i32, i32) {
    %c0_i32 = arith.constant 0 : i32
    %c0_i32_0 = arith.constant 0 : i32
    %c0_i32_1 = arith.constant 0 : i32
    return %c0_i32, %c0_i32_0 : i32, i32
  }
  func.func @transform_12(%arg0: i32) -> (i32, i32) {
    %c0_i32 = arith.constant 0 : i32
    %c0_i32_0 = arith.constant 0 : i32
    %c0_i32_1 = arith.constant 0 : i32
    return %c0_i32, %c0_i32_0 : i32, i32
  }
  func.func @transform_13(%arg0: i32) -> (i32, i32) {
    %c0_i32 = arith.constant 0 : i32
    %c0_i32_0 = arith.constant 0 : i32
    %c0_i32_1 = arith.constant 0 : i32
    return %c0_i32, %c0_i32_0 : i32, i32
  }
  func.func @transform_14(%arg0: i32) -> (i32, i32) {
    %c0_i32 = arith.constant 0 : i32
    %c0_i32_0 = arith.constant 0 : i32
    %c0_i32_1 = arith.constant 0 : i32
    return %c0_i32, %c0_i32_0 : i32, i32
  }
  func.func @transform_15(%arg0: i32) -> (i32, i32) {
    %c0_i32 = arith.constant 0 : i32
    %c0_i32_0 = arith.constant 0 : i32
    return %arg0, %c0_i32 : i32, i32
  }
}

</mosaic_0001>

<llo_original>
// kernel: tpu_custom_call.1
$region0: #{tpu_custom_call.1}
  #allocation0 [shape = 'u32[]', space=smem, size = 0x4, offset = 0x4, fixed_abs, tag = 'smem constant byte address 0x4 - core index']
  #allocation1 [shape = 'u32[144,128]{1,0:T(1,128)}', space=vmem, size = 0x12000, scoped, tag = 'internal scratch']
  %s0 = inlined_call_operand.vmem [shape: f32[24,4], index: 0, kind: input, shape index: {}]
  %s1 = inlined_call_operand.hbm [shape: f32[4,32], index: 1, kind: input, shape index: {}]
  %s2 = inlined_call_operand.vmem [shape: bf16[32,128], index: 2, kind: input, shape index: {}]
  %s3 = inlined_call_operand.vmem [shape: bf16[32,128], index: 3, kind: input, shape index: {}]
  %s4 = inlined_call_operand.vmem [shape: bf16[4,128], index: 4, kind: input, shape index: {}]
  %s5 = inlined_call_operand.hbm [shape: f32[1,128], index: 5, kind: input, shape index: {}]
  %s6 = inlined_call_operand.hbm [shape: f32[1,128], index: 6, kind: input, shape index: {}]
  %s7 = inlined_call_operand.vmem [shape: f32[1,128], index: 7, kind: input, shape index: {}]
  %s8 = inlined_call_operand.vmem [shape: bf16[128,128], index: 8, kind: input, shape index: {}]
  %s9 = inlined_call_operand.vmem [shape: bf16[128,32], index: 9, kind: input, shape index: {}]
  %s10 = inlined_call_operand.vmem [shape: f32[1,32], index: 10, kind: input, shape index: {}]
  %s11 = inlined_call_operand.vmem [shape: f32[1,32], index: 11, kind: input, shape index: {}]
  %s12 = inlined_call_operand.vmem [shape: f32[1,32], index: 12, kind: input, shape index: {}]
  %s13 = inlined_call_operand.vmem [shape: bf16[32,32], index: 13, kind: input, shape index: {}]
  %s14 = inlined_call_operand.vmem [shape: f32[1,32], index: 14, kind: input, shape index: {}]
  %s15 = inlined_call_operand.hbm [shape: f32[24,32], index: 15, kind: output, shape index: {}]
  %s16 = sld [smem:[#allocation0]]
  $region82: #{tpu_custom_call.1} parent=0
    _
  %s18 = ssub.s32 1, %s16
  %s19 = scalar_select 0, %s18, %s16
  $region1: #{tpu_custom_call.1} parent=0
    #allocation2 [shape = 'u8[2048]{0}', space=vmem, size = 0x800, scoped, tag = 'input window, operand 1, single buffered']
    #allocation3 [shape = 's32[1]{0}', space=sflag, size = 0x4, scoped, tag = 'scoped memory for tpu_custom_call.1']
    #allocation4 [shape = 's32[1]{0}', space=sflag, size = 0x4, scoped, tag = 'scoped memory for tpu_custom_call.1']
    #allocation5 [shape = 'u8[512]{0}', space=vmem, size = 0x400, scoped, tag = 'input window, operand 5, single buffered']
    #allocation6 [shape = 's32[1]{0}', space=sflag, size = 0x4, scoped, tag = 'scoped memory for tpu_custom_call.1']
    #allocation7 [shape = 'u8[512]{0}', space=vmem, size = 0x400, scoped, tag = 'input window, operand 6, single buffered']
    #allocation8 [shape = 'u8[12288]{0}', space=vmem, size = 0x3000, scoped, tag = 'output window, operand 0, single buffered']
    %20 = vsyncpa [#allocation3], 0
    %21 = vsyncpa [#allocation6], 0
    %22 = vsyncpa [#allocation4], 0
    // Predicated region
    $region2: #{tpu_custom_call.1} parent=1 // pred_check
      _
    $region3: #{tpu_custom_call.1} parent=1 // pred_check_branch
      %24 = sbr.rel (0) target = $region5
    $region4: #{tpu_custom_call.1} parent=1 // pred_region
      _
    $region5: #{tpu_custom_call.1} parent=1 // pred_fallthru
      _
    // Predicated region
    $region6: #{tpu_custom_call.1} parent=1 // pred_check
      _
    $region7: #{tpu_custom_call.1} parent=1 // pred_check_branch
      %26 = sbr.rel (0) target = $region9
    $region8: #{tpu_custom_call.1} parent=1 // pred_region
      %s28 = ssub.s32 64, 64
      %29 = vsyncadd [#allocation3], %s28
      %s31 = sshll.u32 [#allocation2], 4
      %s32 = int_to_ptr.vmem [resolvable:$true] %s31
      %34 = dma.hbm_to_vmem [thread:$0]  %s1, 64, %s32, [#allocation3]
    $region9: #{tpu_custom_call.1} parent=1 // pred_fallthru
      _
    // Predicated region
    $region10: #{tpu_custom_call.1} parent=1 // pred_check
      _
    $region11: #{tpu_custom_call.1} parent=1 // pred_check_branch
      %36 = sbr.rel (0) target = $region13
    $region12: #{tpu_custom_call.1} parent=1 // pred_region
      _
    $region13: #{tpu_custom_call.1} parent=1 // pred_fallthru
      _
    // Predicated region
    $region14: #{tpu_custom_call.1} parent=1 // pred_check
      _
    $region15: #{tpu_custom_call.1} parent=1 // pred_check_branch
      %38 = sbr.rel (0) target = $region17
    $region16: #{tpu_custom_call.1} parent=1 // pred_region
      _
    $region17: #{tpu_custom_call.1} parent=1 // pred_fallthru
      _
    // Predicated region
    $region18: #{tpu_custom_call.1} parent=1 // pred_check
      _
    $region19: #{tpu_custom_call.1} parent=1 // pred_check_branch
      %40 = sbr.rel (0) target = $region21
    $region20: #{tpu_custom_call.1} parent=1 // pred_region
      _
    $region21: #{tpu_custom_call.1} parent=1 // pred_fallthru
      _
    // Predicated region
    $region22: #{tpu_custom_call.1} parent=1 // pred_check
      _
    $region23: #{tpu_custom_call.1} parent=1 // pred_check_branch
      %42 = sbr.rel (0) target = $region25
    $region24: #{tpu_custom_call.1} parent=1 // pred_region
      %s44 = ssub.s32 16, 16
      %45 = vsyncadd [#allocation6], %s44
      %s47 = sshll.u32 [#allocation5], 4
      %s48 = int_to_ptr.vmem [resolvable:$true] %s47
      %50 = dma.hbm_to_vmem [thread:$0]  %s5, 16, %s48, [#allocation6]
    $region25: #{tpu_custom_call.1} parent=1 // pred_fallthru
      _
    // Predicated region
    $region26: #{tpu_custom_call.1} parent=1 // pred_check
      _
    $region27: #{tpu_custom_call.1} parent=1 // pred_check_branch
      %52 = sbr.rel (0) target = $region29
    $region28: #{tpu_custom_call.1} parent=1 // pred_region
      %s54 = ssub.s32 16, 16
      %55 = vsyncadd [#allocation6], %s54
      %s57 = sshll.u32 [#allocation7], 4
      %s58 = int_to_ptr.vmem [resolvable:$true] %s57
      %60 = dma.hbm_to_vmem [thread:$0]  %s6, 16, %s58, [#allocation6]
    $region29: #{tpu_custom_call.1} parent=1 // pred_fallthru
      _
    // Predicated region
    $region30: #{tpu_custom_call.1} parent=1 // pred_check
      _
    $region31: #{tpu_custom_call.1} parent=1 // pred_check_branch
      %62 = sbr.rel (0) target = $region33
    $region32: #{tpu_custom_call.1} parent=1 // pred_region
      _
    $region33: #{tpu_custom_call.1} parent=1 // pred_fallthru
      _
    // Predicated region
    $region34: #{tpu_custom_call.1} parent=1 // pred_check
      _
    $region35: #{tpu_custom_call.1} parent=1 // pred_check_branch
      %64 = sbr.rel (0) target = $region37
    $region36: #{tpu_custom_call.1} parent=1 // pred_region
      _
    $region37: #{tpu_custom_call.1} parent=1 // pred_fallthru
      _
    // Predicated region
    $region38: #{tpu_custom_call.1} parent=1 // pred_check
      _
    $region39: #{tpu_custom_call.1} parent=1 // pred_check_branch
      %66 = sbr.rel (0) target = $region41
    $region40: #{tpu_custom_call.1} parent=1 // pred_region
      _
    $region41: #{tpu_custom_call.1} parent=1 // pred_fallthru
      _
    // Predicated region
    $region42: #{tpu_custom_call.1} parent=1 // pred_check
      _
    $region43: #{tpu_custom_call.1} parent=1 // pred_check_branch
      %68 = sbr.rel (0) target = $region45
    $region44: #{tpu_custom_call.1} parent=1 // pred_region
      _
    $region45: #{tpu_custom_call.1} parent=1 // pred_fallthru
      _
    // Predicated region
    $region46: #{tpu_custom_call.1} parent=1 // pred_check
      _
    $region47: #{tpu_custom_call.1} parent=1 // pred_check_branch
      %70 = sbr.rel (0) target = $region49
    $region48: #{tpu_custom_call.1} parent=1 // pred_region
      _
    $region49: #{tpu_custom_call.1} parent=1 // pred_fallthru
      _
    // Predicated region
    $region50: #{tpu_custom_call.1} parent=1 // pred_check
      _
    $region51: #{tpu_custom_call.1} parent=1 // pred_check_branch
      %72 = sbr.rel (0) target = $region53
    $region52: #{tpu_custom_call.1} parent=1 // pred_region
      _
    $region53: #{tpu_custom_call.1} parent=1 // pred_fallthru
      _
    // Predicated region
    $region54: #{tpu_custom_call.1} parent=1 // pred_check
      _
    $region55: #{tpu_custom_call.1} parent=1 // pred_check_branch
      %74 = sbr.rel (0) target = $region57
    $region56: #{tpu_custom_call.1} parent=1 // pred_region
      _
    $region57: #{tpu_custom_call.1} parent=1 // pred_fallthru
      _
    // Predicated region
    $region58: #{tpu_custom_call.1} parent=1 // pred_check
      _
    $region59: #{tpu_custom_call.1} parent=1 // pred_check_branch
      %76 = sbr.rel (0) target = $region61
    $region60: #{tpu_custom_call.1} parent=1 // pred_region
      _
    $region61: #{tpu_custom_call.1} parent=1 // pred_fallthru
      _
    // Predicated region
    $region62: #{tpu_custom_call.1} parent=1 // pred_check
      _
    $region63: #{tpu_custom_call.1} parent=1 // pred_check_branch
      %78 = sbr.rel (0) target = $region65
    $region64: #{tpu_custom_call.1} parent=1 // pred_region
      %79 = dma.done [#allocation3], 64
    $region65: #{tpu_custom_call.1} parent=1 // pred_fallthru
      _
    // Predicated region
    $region66: #{tpu_custom_call.1} parent=1 // pred_check
      _
    $region67: #{tpu_custom_call.1} parent=1 // pred_check_branch
      %81 = sbr.rel (0) target = $region69
    $region68: #{tpu_custom_call.1} parent=1 // pred_region
      %82 = dma.done [#allocation6], 16
    $region69: #{tpu_custom_call.1} parent=1 // pred_fallthru
      _
    // Predicated region
    $region70: #{tpu_custom_call.1} parent=1 // pred_check
      _
    $region71: #{tpu_custom_call.1} parent=1 // pred_check_branch
      %84 = sbr.rel (0) target = $region73
    $region72: #{tpu_custom_call.1} parent=1 // pred_region
      %85 = dma.done [#allocation6], 16
    $region73: #{tpu_custom_call.1} parent=1 // pred_fallthru
      _
    %v87 = vld [vmem:[%s0] sm:$0xff]
    %v88 = vld [vmem:[%s0 + $0x8] sm:$0xff]
    %v89 = vld [vmem:[%s0 + $0x10] sm:$0xff]
    %v90 = vld [vmem:[#allocation2] sm:$0xf]
    %vm91 = vcmask 31744
    %v93 = vsel %vm91, %v87, 0
    %v96 = vsel %vm91, %v88, 0
    %v99 = vsel %vm91, %v89, 0
    %vm101 = vcmask 1043456
    %v103 = vsel %vm101, %v90, 0
    %105 = vmatprep.subr.mxu0 0.0
    %v106 = vand.u32 %v103, 4294901760
    %107 = vmatpush1.msra.mxu0 %v106
    %108 = vmatprep.subr.mxu0 0.0
    %109 = vmatpush1.msra.mxu0 0.0
    %110 = vmatprep.subr.mxu0 0.0
    %111 = vmatpush1.msra.mxu0 0.0
    %112 = vmatprep.subr.mxu0 0.0
    %113 = vmatpush1.msra.mxu0 0.0
    %114 = vmatprep.subr.mxu0 0.0
    %115 = vmatpush1.msra.mxu0 0.0
    %116 = vmatprep.subr.mxu0 0.0
    %117 = vmatpush1.msra.mxu0 0.0
    %118 = vmatprep.subr.mxu0 0.0
    %119 = vmatpush1.msra.mxu0 0.0
    %120 = vmatprep.subr.mxu0 0.0
    %121 = vmatpush1.msra.mxu0 0.0
    %122 = vmatprep.subr.mxu0 0.0
    %123 = vmatpush1.msra.mxu0 0.0
    %124 = vmatprep.subr.mxu0 0.0
    %125 = vmatpush1.msra.mxu0 0.0
    %126 = vmatprep.subr.mxu0 0.0
    %127 = vmatpush1.msra.mxu0 0.0
    %128 = vmatprep.subr.mxu0 0.0
    %129 = vmatpush1.msra.mxu0 0.0
    %130 = vmatprep.subr.mxu0 0.0
    %131 = vmatpush1.msra.mxu0 0.0
    %132 = vmatprep.subr.mxu0 0.0
    %133 = vmatpush1.msra.mxu0 0.0
    %134 = vmatprep.subr.mxu0 0.0
    %135 = vmatpush1.msra.mxu0 0.0
    %136 = vmatprep.subr.mxu0 0.0
    %137 = vmatpush1.msra.mxu0 0.0
    %138 = vmatprep.subr.mxu0 0.0
    %139 = vmatpush1.msra.mxu0 0.0
    %140 = vmatprep.subr.mxu0 0.0
    %141 = vmatpush1.msra.mxu0 0.0
    %142 = vmatprep.subr.mxu0 0.0
    %143 = vmatpush1.msra.mxu0 0.0
    %144 = vmatprep.subr.mxu0 0.0
    %145 = vmatpush1.msra.mxu0 0.0
    %146 = vmatprep.subr.mxu0 0.0
    %147 = vmatpush1.msra.mxu0 0.0
    %148 = vmatprep.subr.mxu0 0.0
    %149 = vmatpush1.msra.mxu0 0.0
    %150 = vmatprep.subr.mxu0 0.0
    %151 = vmatpush1.msra.mxu0 0.0
    %152 = vmatprep.subr.mxu0 0.0
    %153 = vmatpush1.msra.mxu0 0.0
    %154 = vmatprep.subr.mxu0 0.0
    %155 = vmatpush1.msra.mxu0 0.0
    %156 = vmatprep.subr.mxu0 0.0
    %157 = vmatpush1.msra.mxu0 0.0
    %158 = vmatprep.subr.mxu0 0.0
    %159 = vmatpush1.msra.mxu0 0.0
    %160 = vmatprep.subr.mxu0 0.0
    %161 = vmatpush1.msra.mxu0 0.0
    %162 = vmatprep.subr.mxu0 0.0
    %163 = vmatpush1.msra.mxu0 0.0
    %164 = vmatprep.subr.mxu0 0.0
    %165 = vmatpush1.msra.mxu0 0.0
    %166 = vmatprep.subr.mxu0 0.0
    %167 = vmatpush1.msra.mxu0 0.0
    %168 = vmatprep.subr.mxu0 0.0
    %169 = vmatpush1.msra.mxu0 0.0
    %170 = vmatprep.mubr.f32.mxu0 0.0
    %v171 = vand.u32 %v93, 4294901760
    %v172 = vsub.f32 %v93, %v171
    %v173 = vand.u32 %v172, 4294901760
    %v174 = vsub.f32 %v172, %v173
    %v175 = vand.u32 %v174, 4294901760
    %176 = vmatmul.mubr.f32.gmra.mrb[0].mxu0 %v175
    %v177 = vpop.f32.mrb[0].mxu0
    %v178 = vadd.f32 0.0, %v177
    %v179 = vpop.f32.mrb[0].mxu0
    %180 = vmatprep.mubr.f32.mxu0 0.0
    %v181 = vand.u32 %v96, 4294901760
    %v182 = vsub.f32 %v96, %v181
    %v183 = vand.u32 %v182, 4294901760
    %v184 = vsub.f32 %v182, %v183
    %v185 = vand.u32 %v184, 4294901760
    %186 = vmatmul.mubr.f32.gmra.mrb[0].mxu0 %v185
    %v187 = vpop.f32.mrb[0].mxu0
    %v188 = vadd.f32 0.0, %v187
    %v189 = vpop.f32.mrb[0].mxu0
    %190 = vmatprep.mubr.f32.mxu0 0.0
    %v191 = vand.u32 %v99, 4294901760
    %v192 = vsub.f32 %v99, %v191
    %v193 = vand.u32 %v192, 4294901760
    %v194 = vsub.f32 %v192, %v193
    %v195 = vand.u32 %v194, 4294901760
    %196 = vmatmul.mubr.f32.gmra.mrb[0].mxu0 %v195
    %v197 = vpop.f32.mrb[0].mxu0
    %v198 = vadd.f32 0.0, %v197
    %v199 = vpop.f32.mrb[0].mxu0
    %200 = vdwg.mxu0
    %201 = vmatprep.subr.mxu0 0.0
    %v202 = vand.u32 %v103, 4294901760
    %v203 = vsub.f32 %v103, %v202
    %v204 = vand.u32 %v203, 4294901760
    %v205 = vsub.f32 %v203, %v204
    %v206 = vand.u32 %v205, 4294901760
    %207 = vmatpush1.msra.mxu0 %v206
    %208 = vmatprep.subr.mxu0 0.0
    %209 = vmatpush1.msra.mxu0 0.0
    %210 = vmatprep.subr.mxu0 0.0
    %211 = vmatpush1.msra.mxu0 0.0
    %212 = vmatprep.subr.mxu0 0.0
    %213 = vmatpush1.msra.mxu0 0.0
    %214 = vmatprep.subr.mxu0 0.0
    %215 = vmatpush1.msra.mxu0 0.0
    %216 = vmatprep.subr.mxu0 0.0
    %217 = vmatpush1.msra.mxu0 0.0
    %218 = vmatprep.subr.mxu0 0.0
    %219 = vmatpush1.msra.mxu0 0.0
    %220 = vmatprep.subr.mxu0 0.0
    %221 = vmatpush1.msra.mxu0 0.0
    %222 = vmatprep.subr.mxu0 0.0
    %223 = vmatpush1.msra.mxu0 0.0
    %224 = vmatprep.subr.mxu0 0.0
    %225 = vmatpush1.msra.mxu0 0.0
    %226 = vmatprep.subr.mxu0 0.0
    %227 = vmatpush1.msra.mxu0 0.0
    %228 = vmatprep.subr.mxu0 0.0
    %229 = vmatpush1.msra.mxu0 0.0
    %230 = vmatprep.subr.mxu0 0.0
    %231 = vmatpush1.msra.mxu0 0.0
    %232 = vmatprep.subr.mxu0 0.0
    %233 = vmatpush1.msra.mxu0 0.0
    %234 = vmatprep.subr.mxu0 0.0
    %235 = vmatpush1.msra.mxu0 0.0
    %236 = vmatprep.subr.mxu0 0.0
    %237 = vmatpush1.msra.mxu0 0.0
    %238 = vmatprep.subr.mxu0 0.0
    %239 = vmatpush1.msra.mxu0 0.0
    %240 = vmatprep.subr.mxu0 0.0
    %241 = vmatpush1.msra.mxu0 0.0
    %242 = vmatprep.subr.mxu0 0.0
    %243 = vmatpush1.msra.mxu0 0.0
    %244 = vmatprep.subr.mxu0 0.0
    %245 = vmatpush1.msra.mxu0 0.0
    %246 = vmatprep.subr.mxu0 0.0
    %247 = vmatpush1.msra.mxu0 0.0
    %248 = vmatprep.subr.mxu0 0.0
    %249 = vmatpush1.msra.mxu0 0.0
    %250 = vmatprep.subr.mxu0 0.0
    %251 = vmatpush1.msra.mxu0 0.0
    %252 = vmatprep.subr.mxu0 0.0
    %253 = vmatpush1.msra.mxu0 0.0
    %254 = vmatprep.subr.mxu0 0.0
    %255 = vmatpush1.msra.mxu0 0.0
    %256 = vmatprep.subr.mxu0 0.0
    %257 = vmatpush1.msra.mxu0 0.0
    %258 = vmatprep.subr.mxu0 0.0
    %259 = vmatpush1.msra.mxu0 0.0
    %260 = vmatprep.subr.mxu0 0.0
    %261 = vmatpush1.msra.mxu0 0.0
    %262 = vmatprep.subr.mxu0 0.0
    %263 = vmatpush1.msra.mxu0 0.0
    %264 = vmatprep.subr.mxu0 0.0
    %265 = vmatpush1.msra.mxu0 0.0
    %266 = vmatprep.subr.mxu0 0.0
    %267 = vmatpush1.msra.mxu0 0.0
    %268 = vmatprep.subr.mxu0 0.0
    %269 = vmatpush1.msra.mxu0 0.0
    %270 = vmatprep.mubr.f32.mxu0 0.0
    %v271 = vand.u32 %v93, 4294901760
    %272 = vmatmul.mubr.f32.gmra.mrb[0].mxu0 %v271
    %v273 = vpop.f32.mrb[0].mxu0
    %v274 = vadd.f32 %v178, %v273
    %v275 = vpop.f32.mrb[0].mxu0
    %276 = vmatprep.mubr.f32.mxu0 0.0
    %v277 = vand.u32 %v96, 4294901760
    %278 = vmatmul.mubr.f32.gmra.mrb[0].mxu0 %v277
    %v279 = vpop.f32.mrb[0].mxu0
    %v280 = vadd.f32 %v188, %v279
    %v281 = vpop.f32.mrb[0].mxu0
    %282 = vmatprep.mubr.f32.mxu0 0.0
    %v283 = vand.u32 %v99, 4294901760
    %284 = vmatmul.mubr.f32.gmra.mrb[0].mxu0 %v283
    %v285 = vpop.f32.mrb[0].mxu0
    %v286 = vadd.f32 %v198, %v285
    %v287 = vpop.f32.mrb[0].mxu0
    %288 = vdwg.mxu0
    %289 = vmatprep.subr.mxu0 0.0
    %v290 = vand.u32 %v103, 4294901760
    %v291 = vsub.f32 %v103, %v290
    %292 = vmatpush1.msra.mxu0 %v291
    %293 = vmatprep.subr.mxu0 0.0
    %294 = vmatpush1.msra.mxu0 0.0
    %295 = vmatprep.subr.mxu0 0.0
    %296 = vmatpush1.msra.mxu0 0.0
    %297 = vmatprep.subr.mxu0 0.0
    %298 = vmatpush1.msra.mxu0 0.0
    %299 = vmatprep.subr.mxu0 0.0
    %300 = vmatpush1.msra.mxu0 0.0
    %301 = vmatprep.subr.mxu0 0.0
    %302 = vmatpush1.msra.mxu0 0.0
    %303 = vmatprep.subr.mxu0 0.0
    %304 = vmatpush1.msra.mxu0 0.0
    %305 = vmatprep.subr.mxu0 0.0
    %306 = vmatpush1.msra.mxu0 0.0
    %307 = vmatprep.subr.mxu0 0.0
    %308 = vmatpush1.msra.mxu0 0.0
    %309 = vmatprep.subr.mxu0 0.0
    %310 = vmatpush1.msra.mxu0 0.0
    %311 = vmatprep.subr.mxu0 0.0
    %312 = vmatpush1.msra.mxu0 0.0
    %313 = vmatprep.subr.mxu0 0.0
    %314 = vmatpush1.msra.mxu0 0.0
    %315 = vmatprep.subr.mxu0 0.0
    %316 = vmatpush1.msra.mxu0 0.0
    %317 = vmatprep.subr.mxu0 0.0
    %318 = vmatpush1.msra.mxu0 0.0
    %319 = vmatprep.subr.mxu0 0.0
    %320 = vmatpush1.msra.mxu0 0.0
    %321 = vmatprep.subr.mxu0 0.0
    %322 = vmatpush1.msra.mxu0 0.0
    %323 = vmatprep.subr.mxu0 0.0
    %324 = vmatpush1.msra.mxu0 0.0
    %325 = vmatprep.subr.mxu0 0.0
    %326 = vmatpush1.msra.mxu0 0.0
    %327 = vmatprep.subr.mxu0 0.0
    %328 = vmatpush1.msra.mxu0 0.0
    %329 = vmatprep.subr.mxu0 0.0
    %330 = vmatpush1.msra.mxu0 0.0
    %331 = vmatprep.subr.mxu0 0.0
    %332 = vmatpush1.msra.mxu0 0.0
    %333 = vmatprep.subr.mxu0 0.0
    %334 = vmatpush1.msra.mxu0 0.0
    %335 = vmatprep.subr.mxu0 0.0
    %336 = vmatpush1.msra.mxu0 0.0
    %337 = vmatprep.subr.mxu0 0.0
    %338 = vmatpush1.msra.mxu0 0.0
    %339 = vmatprep.subr.mxu0 0.0
    %340 = vmatpush1.msra.mxu0 0.0
    %341 = vmatprep.subr.mxu0 0.0
    %342 = vmatpush1.msra.mxu0 0.0
    %343 = vmatprep.subr.mxu0 0.0
    %344 = vmatpush1.msra.mxu0 0.0
    %345 = vmatprep.subr.mxu0 0.0
    %346 = vmatpush1.msra.mxu0 0.0
    %347 = vmatprep.subr.mxu0 0.0
    %348 = vmatpush1.msra.mxu0 0.0
    %349 = vmatprep.subr.mxu0 0.0
    %350 = vmatpush1.msra.mxu0 0.0
    %351 = vmatprep.subr.mxu0 0.0
    %352 = vmatpush1.msra.mxu0 0.0
    %353 = vmatprep.subr.mxu0 0.0
    %354 = vmatpush1.msra.mxu0 0.0
    %355 = vmatprep.mubr.f32.mxu0 0.0
    %v356 = vand.u32 %v93, 4294901760
    %v357 = vsub.f32 %v93, %v356
    %358 = vmatmul.mubr.f32.gmra.mrb[0].mxu0 %v357
    %v359 = vpop.f32.mrb[0].mxu0
    %v360 = vadd.f32 %v274, %v359
    %v361 = vpop.f32.mrb[0].mxu0
    %362 = vmatprep.mubr.f32.mxu0 0.0
    %v363 = vand.u32 %v96, 4294901760
    %v364 = vsub.f32 %v96, %v363
    %365 = vmatmul.mubr.f32.gmra.mrb[0].mxu0 %v364
    %v366 = vpop.f32.mrb[0].mxu0
    %v367 = vadd.f32 %v280, %v366
    %v368 = vpop.f32.mrb[0].mxu0
    %369 = vmatprep.mubr.f32.mxu0 0.0
    %v370 = vand.u32 %v99, 4294901760
    %v371 = vsub.f32 %v99, %v370
    %372 = vmatmul.mubr.f32.gmra.mrb[0].mxu0 %v371
    %v373 = vpop.f32.mrb[0].mxu0
    %v374 = vadd.f32 %v286, %v373
    %v375 = vpop.f32.mrb[0].mxu0
    %376 = vdwg.mxu0
    %377 = vmatprep.subr.mxu0 0.0
    %v378 = vand.u32 %v103, 4294901760
    %379 = vmatpush1.msra.mxu0 %v378
    %380 = vmatprep.subr.mxu0 0.0
    %381 = vmatpush1.msra.mxu0 0.0
    %382 = vmatprep.subr.mxu0 0.0
    %383 = vmatpush1.msra.mxu0 0.0
    %384 = vmatprep.subr.mxu0 0.0
    %385 = vmatpush1.msra.mxu0 0.0
    %386 = vmatprep.subr.mxu0 0.0
    %387 = vmatpush1.msra.mxu0 0.0
    %388 = vmatprep.subr.mxu0 0.0
    %389 = vmatpush1.msra.mxu0 0.0
    %390 = vmatprep.subr.mxu0 0.0
    %391 = vmatpush1.msra.mxu0 0.0
    %392 = vmatprep.subr.mxu0 0.0
    %393 = vmatpush1.msra.mxu0 0.0
    %394 = vmatprep.subr.mxu0 0.0
    %395 = vmatpush1.msra.mxu0 0.0
    %396 = vmatprep.subr.mxu0 0.0
    %397 = vmatpush1.msra.mxu0 0.0
    %398 = vmatprep.subr.mxu0 0.0
    %399 = vmatpush1.msra.mxu0 0.0
    %400 = vmatprep.subr.mxu0 0.0
    %401 = vmatpush1.msra.mxu0 0.0
    %402 = vmatprep.subr.mxu0 0.0
    %403 = vmatpush1.msra.mxu0 0.0
    %404 = vmatprep.subr.mxu0 0.0
    %405 = vmatpush1.msra.mxu0 0.0
    %406 = vmatprep.subr.mxu0 0.0
    %407 = vmatpush1.msra.mxu0 0.0
    %408 = vmatprep.subr.mxu0 0.0
    %409 = vmatpush1.msra.mxu0 0.0
    %410 = vmatprep.subr.mxu0 0.0
    %411 = vmatpush1.msra.mxu0 0.0
    %412 = vmatprep.subr.mxu0 0.0
    %413 = vmatpush1.msra.mxu0 0.0
    %414 = vmatprep.subr.mxu0 0.0
    %415 = vmatpush1.msra.mxu0 0.0
    %416 = vmatprep.subr.mxu0 0.0
    %417 = vmatpush1.msra.mxu0 0.0
    %418 = vmatprep.subr.mxu0 0.0
    %419 = vmatpush1.msra.mxu0 0.0
    %420 = vmatprep.subr.mxu0 0.0
    %421 = vmatpush1.msra.mxu0 0.0
    %422 = vmatprep.subr.mxu0 0.0
    %423 = vmatpush1.msra.mxu0 0.0
    %424 = vmatprep.subr.mxu0 0.0
    %425 = vmatpush1.msra.mxu0 0.0
    %426 = vmatprep.subr.mxu0 0.0
    %427 = vmatpush1.msra.mxu0 0.0
    %428 = vmatprep.subr.mxu0 0.0
    %429 = vmatpush1.msra.mxu0 0.0
    %430 = vmatprep.subr.mxu0 0.0
    %431 = vmatpush1.msra.mxu0 0.0
    %432 = vmatprep.subr.mxu0 0.0
    %433 = vmatpush1.msra.mxu0 0.0
    %434 = vmatprep.subr.mxu0 0.0
    %435 = vmatpush1.msra.mxu0 0.0
    %436 = vmatprep.subr.mxu0 0.0
    %437 = vmatpush1.msra.mxu0 0.0
    %438 = vmatprep.subr.mxu0 0.0
    %439 = vmatpush1.msra.mxu0 0.0
    %440 = vmatprep.subr.mxu0 0.0
    %441 = vmatpush1.msra.mxu0 0.0
    %442 = vmatprep.mubr.f32.mxu0 0.0
    %v443 = vand.u32 %v93, 4294901760
    %v444 = vsub.f32 %v93, %v443
    %v445 = vand.u32 %v444, 4294901760
    %446 = vmatmul.mubr.f32.gmra.mrb[0].mxu0 %v445
    %v447 = vpop.f32.mrb[0].mxu0
    %v448 = vadd.f32 %v360, %v447
    %v449 = vpop.f32.mrb[0].mxu0
    %450 = vmatprep.mubr.f32.mxu0 0.0
    %v451 = vand.u32 %v96, 4294901760
    %v452 = vsub.f32 %v96, %v451
    %v453 = vand.u32 %v452, 4294901760
    %454 = vmatmul.mubr.f32.gmra.mrb[0].mxu0 %v453
    %v455 = vpop.f32.mrb[0].mxu0
    %v456 = vadd.f32 %v367, %v455
    %v457 = vpop.f32.mrb[0].mxu0
    %458 = vmatprep.mubr.f32.mxu0 0.0
    %v459 = vand.u32 %v99, 4294901760
    %v460 = vsub.f32 %v99, %v459
    %v461 = vand.u32 %v460, 4294901760
    %462 = vmatmul.mubr.f32.gmra.mrb[0].mxu0 %v461
    %v463 = vpop.f32.mrb[0].mxu0
    %v464 = vadd.f32 %v374, %v463
    %v465 = vpop.f32.mrb[0].mxu0
    %466 = vdwg.mxu0
    %467 = vmatprep.subr.mxu0 0.0
    %v468 = vand.u32 %v103, 4294901760
    %v469 = vsub.f32 %v103, %v468
    %v470 = vand.u32 %v469, 4294901760
    %471 = vmatpush1.msra.mxu0 %v470
    %472 = vmatprep.subr.mxu0 0.0
    %473 = vmatpush1.msra.mxu0 0.0
    %474 = vmatprep.subr.mxu0 0.0
    %475 = vmatpush1.msra.mxu0 0.0
    %476 = vmatprep.subr.mxu0 0.0
    %477 = vmatpush1.msra.mxu0 0.0
    %478 = vmatprep.subr.mxu0 0.0
    %479 = vmatpush1.msra.mxu0 0.0
    %480 = vmatprep.subr.mxu0 0.0
    %481 = vmatpush1.msra.mxu0 0.0
    %482 = vmatprep.subr.mxu0 0.0
    %483 = vmatpush1.msra.mxu0 0.0
    %484 = vmatprep.subr.mxu0 0.0
    %485 = vmatpush1.msra.mxu0 0.0
    %486 = vmatprep.subr.mxu0 0.0
    %487 = vmatpush1.msra.mxu0 0.0
    %488 = vmatprep.subr.mxu0 0.0
    %489 = vmatpush1.msra.mxu0 0.0
    %490 = vmatprep.subr.mxu0 0.0
    %491 = vmatpush1.msra.mxu0 0.0
    %492 = vmatprep.subr.mxu0 0.0
    %493 = vmatpush1.msra.mxu0 0.0
    %494 = vmatprep.subr.mxu0 0.0
    %495 = vmatpush1.msra.mxu0 0.0
    %496 = vmatprep.subr.mxu0 0.0
    %497 = vmatpush1.msra.mxu0 0.0
    %498 = vmatprep.subr.mxu0 0.0
    %499 = vmatpush1.msra.mxu0 0.0
    %500 = vmatprep.subr.mxu0 0.0
    %501 = vmatpush1.msra.mxu0 0.0
    %502 = vmatprep.subr.mxu0 0.0
    %503 = vmatpush1.msra.mxu0 0.0
    %504 = vmatprep.subr.mxu0 0.0
    %505 = vmatpush1.msra.mxu0 0.0
    %506 = vmatprep.subr.mxu0 0.0
    %507 = vmatpush1.msra.mxu0 0.0
    %508 = vmatprep.subr.mxu0 0.0
    %509 = vmatpush1.msra.mxu0 0.0
    %510 = vmatprep.subr.mxu0 0.0
    %511 = vmatpush1.msra.mxu0 0.0
    %512 = vmatprep.subr.mxu0 0.0
    %513 = vmatpush1.msra.mxu0 0.0
    %514 = vmatprep.subr.mxu0 0.0
    %515 = vmatpush1.msra.mxu0 0.0
    %516 = vmatprep.subr.mxu0 0.0
    %517 = vmatpush1.msra.mxu0 0.0
    %518 = vmatprep.subr.mxu0 0.0
    %519 = vmatpush1.msra.mxu0 0.0
    %520 = vmatprep.subr.mxu0 0.0
    %521 = vmatpush1.msra.mxu0 0.0
    %522 = vmatprep.subr.mxu0 0.0
    %523 = vmatpush1.msra.mxu0 0.0
    %524 = vmatprep.subr.mxu0 0.0
    %525 = vmatpush1.msra.mxu0 0.0
    %526 = vmatprep.subr.mxu0 0.0
    %527 = vmatpush1.msra.mxu0 0.0
    %528 = vmatprep.subr.mxu0 0.0
    %529 = vmatpush1.msra.mxu0 0.0
    %530 = vmatprep.subr.mxu0 0.0
    %531 = vmatpush1.msra.mxu0 0.0
    %532 = vmatprep.subr.mxu0 0.0
    %533 = vmatpush1.msra.mxu0 0.0
    %534 = vmatprep.mubr.f32.mxu0 0.0
    %v535 = vand.u32 %v93, 4294901760
    %536 = vmatmul.mubr.f32.gmra.mrb[0].mxu0 %v535
    %v537 = vpop.f32.mrb[0].mxu0
    %v538 = vadd.f32 %v448, %v537
    %v539 = vpop.f32.mrb[0].mxu0
    %540 = vmatprep.mubr.f32.mxu0 0.0
    %v541 = vand.u32 %v96, 4294901760
    %542 = vmatmul.mubr.f32.gmra.mrb[0].mxu0 %v541
    %v543 = vpop.f32.mrb[0].mxu0
    %v544 = vadd.f32 %v456, %v543
    %v545 = vpop.f32.mrb[0].mxu0
    %546 = vmatprep.mubr.f32.mxu0 0.0
    %v547 = vand.u32 %v99, 4294901760
    %548 = vmatmul.mubr.f32.gmra.mrb[0].mxu0 %v547
    %v549 = vpop.f32.mrb[0].mxu0
    %v550 = vadd.f32 %v464, %v549
    %v551 = vpop.f32.mrb[0].mxu0
    %552 = vdwg.mxu0
    %553 = vmatprep.subr.mxu0 0.0
    %v554 = vand.u32 %v103, 4294901760
    %555 = vmatpush1.msra.mxu0 %v554
    %556 = vmatprep.subr.mxu0 0.0
    %557 = vmatpush1.msra.mxu0 0.0
    %558 = vmatprep.subr.mxu0 0.0
    %559 = vmatpush1.msra.mxu0 0.0
    %560 = vmatprep.subr.mxu0 0.0
    %561 = vmatpush1.msra.mxu0 0.0
    %562 = vmatprep.subr.mxu0 0.0
    %563 = vmatpush1.msra.mxu0 0.0
    %564 = vmatprep.subr.mxu0 0.0
    %565 = vmatpush1.msra.mxu0 0.0
    %566 = vmatprep.subr.mxu0 0.0
    %567 = vmatpush1.msra.mxu0 0.0
    %568 = vmatprep.subr.mxu0 0.0
    %569 = vmatpush1.msra.mxu0 0.0
    %570 = vmatprep.subr.mxu0 0.0
    %571 = vmatpush1.msra.mxu0 0.0
    %572 = vmatprep.subr.mxu0 0.0
    %573 = vmatpush1.msra.mxu0 0.0
    %574 = vmatprep.subr.mxu0 0.0
    %575 = vmatpush1.msra.mxu0 0.0
    %576 = vmatprep.subr.mxu0 0.0
    %577 = vmatpush1.msra.mxu0 0.0
    %578 = vmatprep.subr.mxu0 0.0
    %579 = vmatpush1.msra.mxu0 0.0
    %580 = vmatprep.subr.mxu0 0.0
    %581 = vmatpush1.msra.mxu0 0.0
    %582 = vmatprep.subr.mxu0 0.0
    %583 = vmatpush1.msra.mxu0 0.0
    %584 = vmatprep.subr.mxu0 0.0
    %585 = vmatpush1.msra.mxu0 0.0
    %586 = vmatprep.subr.mxu0 0.0
    %587 = vmatpush1.msra.mxu0 0.0
    %588 = vmatprep.subr.mxu0 0.0
    %589 = vmatpush1.msra.mxu0 0.0
    %590 = vmatprep.subr.mxu0 0.0
    %591 = vmatpush1.msra.mxu0 0.0
    %592 = vmatprep.subr.mxu0 0.0
    %593 = vmatpush1.msra.mxu0 0.0
    %594 = vmatprep.subr.mxu0 0.0
    %595 = vmatpush1.msra.mxu0 0.0
    %596 = vmatprep.subr.mxu0 0.0
    %597 = vmatpush1.msra.mxu0 0.0
    %598 = vmatprep.subr.mxu0 0.0
    %599 = vmatpush1.msra.mxu0 0.0
    %600 = vmatprep.subr.mxu0 0.0
    %601 = vmatpush1.msra.mxu0 0.0
    %602 = vmatprep.subr.mxu0 0.0
    %603 = vmatpush1.msra.mxu0 0.0
    %604 = vmatprep.subr.mxu0 0.0
    %605 = vmatpush1.msra.mxu0 0.0
    %606 = vmatprep.subr.mxu0 0.0
    %607 = vmatpush1.msra.mxu0 0.0
    %608 = vmatprep.subr.mxu0 0.0
    %609 = vmatpush1.msra.mxu0 0.0
    %610 = vmatprep.subr.mxu0 0.0
    %611 = vmatpush1.msra.mxu0 0.0
    %612 = vmatprep.subr.mxu0 0.0
    %613 = vmatpush1.msra.mxu0 0.0
    %614 = vmatprep.subr.mxu0 0.0
    %615 = vmatpush1.msra.mxu0 0.0
    %616 = vmatprep.subr.mxu0 0.0
    %617 = vmatpush1.msra.mxu0 0.0
    %618 = vmatprep.mubr.f32.mxu0 0.0
    %v619 = vand.u32 %v93, 4294901760
    %620 = vmatmul.mubr.f32.gmra.mrb[0].mxu0 %v619
    %v621 = vpop.f32.mrb[0].mxu0
    %v622 = vadd.f32 %v538, %v621
    %v623 = vpop.f32.mrb[0].mxu0
    %624 = vmatprep.mubr.f32.mxu0 0.0
    %v625 = vand.u32 %v96, 4294901760
    %626 = vmatmul.mubr.f32.gmra.mrb[0].mxu0 %v625
    %v627 = vpop.f32.mrb[0].mxu0
    %v628 = vadd.f32 %v544, %v627
    %v629 = vpop.f32.mrb[0].mxu0
    %630 = vmatprep.mubr.f32.mxu0 0.0
    %v631 = vand.u32 %v99, 4294901760
    %632 = vmatmul.mubr.f32.gmra.mrb[0].mxu0 %v631
    %v633 = vpop.f32.mrb[0].mxu0
    %v634 = vadd.f32 %v550, %v633
    %v635 = vpop.f32.mrb[0].mxu0
    %636 = vdwg.mxu0
    %v637 = vand.u32 2147483647, %v622
    %vm638 = vcmp.le.f32.partialorder %v637, 0.7853982
    %vm639 = vcmp.lt.s32.totalorder %v622, 0
    %v640 = vand.u32 %v622, 2139095040
    %v641 = vshrl.u32 %v640, 23
    %v642 = vsub.s32 %v641, 127
    %v643 = vand.u32 2147483647, %v622
    %v644 = vand.u32 %v643, 8388607
    %v645 = vor.u32 %v644, 8388608
    %v646 = vsub.s32 0, %v645
    %v647 = vadd.s32 %v642, 1
    %vm648 = vcmp.gt.s32.totalorder %v647, 0
    %v649 = vsel %vm648, %v647, 0
    %v650 = vshrl.u32 %v649, 5
    %v651 = vand.u32 %v649, 31
    %v652 = vsub.s32 32, %v651
    %v653 = vshrl.u32 683565275, %v652
    %v654 = vshll.u32 683565275, %v651
    %v655 = vshrl.u32 2475754826, %v652
    %v656 = vor.u32 %v654, %v655
    %v657 = vshll.u32 2475754826, %v651
    %v658 = vshrl.u32 2131351028, %v652
    %v659 = vor.u32 %v657, %v658
    %v660 = vshll.u32 2131351028, %v651
    %v661 = vshrl.u32 2102212464, %v652
    %v662 = vor.u32 %v660, %v661
    %v663 = vshll.u32 2102212464, %v651
    %v664 = vshrl.u32 920167782, %v652
    %v665 = vor.u32 %v663, %v664
    %v666 = vshll.u32 920167782, %v651
    %v667 = vshrl.u32 1326507024, %v652
    %v668 = vor.u32 %v666, %v667
    %vm669 = vcmp.lt.s32.totalorder %v650, 1
    %vm670 = vcmp.lt.s32.totalorder %v650, 2
    %vm671 = vcmp.lt.s32.totalorder %v650, 3
    %vm672 = vcmp.lt.s32.totalorder %v650, 4
    %v673 = vsel %vm669, %v653, %v656
    %v674 = vsel %vm672, %v662, 2102212464
    %v675 = vsel %vm671, %v659, %v674
    %v676 = vsel %vm670, %v673, %v675
    %v677 = vsel %vm669, %v656, %v659
    %v678 = vsel %vm672, %v665, 920167782
    %v679 = vsel %vm671, %v662, %v678
    %v680 = vsel %vm670, %v677, %v679
    %v681 = vsel %vm669, %v659, %v662
    %v682 = vsel %vm672, %v668, 1326507024
    %v683 = vsel %vm671, %v665, %v682
    %v684 = vsel %vm670, %v681, %v683
    %v685 = vshll.u32 %v645, 8
    %v686 = vmul.u32.u64.compose %v685, %v684
    %v687 = vextract.low.u32 %v686
    %v688 = vextract.high.u32 %v686
    %v689 = vmul.u32.u64.compose %v685, %v680
    %v690 = vextract.low.u32 %v689
    %v691 = vextract.high.u32 %v689
    %v692 = vmul.u32 %v685, %v676
    %v693 = vadd.s32 %v688, %v690
    %vm694 = vc.u32 %v688, %v690
    %v695 = vadd.s32 %v691, 1
    %v696 = vsel %vm694, %v695, %v691
    %v697 = vadd.s32 %v692, %v696
    %v698 = vadd.s32 %v697, 536870912
    %v699 = vshrl.u32 %v698, 30
    %v700 = vshll.u32 %v699, 30
    %v701 = vsub.s32 %v697, %v700
    %vm702 = vcmp.lt.s32.totalorder %v701, 0
    %v703 = vsub.s32 0, %v701
    %v704 = vsel %vm702, %v703, %v701
    %v705 = vclz %v704
    %v706 = vsub.s32 %v705, 2
    %vm707 = vcmp.gt.s32.totalorder 0, %v706
    %v708 = vsel %vm707, 0, %v706
    %v709 = vsub.s32 32, %v708
    %v710 = vshll.u32 %v701, %v708
    %v711 = vshrl.u32 %v693, %v709
    %v712 = vor.u32 %v710, %v711
    %v713 = vsub.s32 4294967266, %v708
    %v714 = vadd.s32 %v713, 127
    %v715 = vshll.u32 %v714, 23
    %v716 = vor.u32 4788187, %v715
    %v717 = vand.u32 2147483647, %v716
    %v719 = vcvt.s32.f32 %v712
    %v720 = vmul.f32 %v719, %v717
    %v721 = vxor.u32 %v720, 2147483648
    %v722 = vsel %vm639, %v721, %v720
    %v723 = vsub.s32 4, %v699
    %v724 = vsel %vm639, %v723, %v699
    %v725 = vsel %vm638, %v622, %v722
    %v726 = vsel %vm638, 0, %v724
    %v727 = vcosq.f32.pop %v725
    %v728 = vsinq.f32.pop %v725
    %vm729 = vweird.f32 %v622
    %v730 = vand.u32 %v726, 3
    %vm731 = vcmp.lt.s32.totalorder %v730, 2
    %vm732 = vcmp.eq.s32.totalorder %v730, 0
    %v733 = vxor.u32 %v728, 2147483648
    %v734 = vsel %vm732, %v727, %v733
    %vm735 = vcmp.eq.s32.totalorder %v730, 2
    %v736 = vxor.u32 %v727, 2147483648
    %v737 = vsel %vm735, %v736, %v728
    %v738 = vsel %vm731, %v734, %v737
    %v739 = vsel %vm729, nan, %v738
    %v740 = vand.u32 2147483647, %v628
    %vm741 = vcmp.le.f32.partialorder %v740, 0.7853982
    %vm742 = vcmp.lt.s32.totalorder %v628, 0
    %v743 = vand.u32 %v628, 2139095040
    %v744 = vshrl.u32 %v743, 23
    %v745 = vsub.s32 %v744, 127
    %v746 = vand.u32 2147483647, %v628
    %v747 = vand.u32 %v746, 8388607
    %v748 = vor.u32 %v747, 8388608
    %v749 = vsub.s32 0, %v748
    %v750 = vadd.s32 %v745, 1
    %vm751 = vcmp.gt.s32.totalorder %v750, 0
    %v752 = vsel %vm751, %v750, 0
    %v753 = vshrl.u32 %v752, 5
    %v754 = vand.u32 %v752, 31
    %v755 = vsub.s32 32, %v754
    %v756 = vshrl.u32 683565275, %v755
    %v757 = vshll.u32 683565275, %v754
    %v758 = vshrl.u32 2475754826, %v755
    %v759 = vor.u32 %v757, %v758
    %v760 = vshll.u32 2475754826, %v754
    %v761 = vshrl.u32 2131351028, %v755
    %v762 = vor.u32 %v760, %v761
    %v763 = vshll.u32 2131351028, %v754
    %v764 = vshrl.u32 2102212464, %v755
    %v765 = vor.u32 %v763, %v764
    %v766 = vshll.u32 2102212464, %v754
    %v767 = vshrl.u32 920167782, %v755
    %v768 = vor.u32 %v766, %v767
    %v769 = vshll.u32 920167782, %v754
    %v770 = vshrl.u32 1326507024, %v755
    %v771 = vor.u32 %v769, %v770
    %vm772 = vcmp.lt.s32.totalorder %v753, 1
    %vm773 = vcmp.lt.s32.totalorder %v753, 2
    %vm774 = vcmp.lt.s32.totalorder %v753, 3
    %vm775 = vcmp.lt.s32.totalorder %v753, 4
    %v776 = vsel %vm772, %v756, %v759
    %v777 = vsel %vm775, %v765, 2102212464
    %v778 = vsel %vm774, %v762, %v777
    %v779 = vsel %vm773, %v776, %v778
    %v780 = vsel %vm772, %v759, %v762
    %v781 = vsel %vm775, %v768, 920167782
    %v782 = vsel %vm774, %v765, %v781
    %v783 = vsel %vm773, %v780, %v782
    %v784 = vsel %vm772, %v762, %v765
    %v785 = vsel %vm775, %v771, 1326507024
    %v786 = vsel %vm774, %v768, %v785
    %v787 = vsel %vm773, %v784, %v786
    %v788 = vshll.u32 %v748, 8
    %v789 = vmul.u32.u64.compose %v788, %v787
    %v790 = vextract.low.u32 %v789
    %v791 = vextract.high.u32 %v789
    %v792 = vmul.u32.u64.compose %v788, %v783
    %v793 = vextract.low.u32 %v792
    %v794 = vextract.high.u32 %v792
    %v795 = vmul.u32 %v788, %v779
    %v796 = vadd.s32 %v791, %v793
    %vm797 = vc.u32 %v791, %v793
    %v798 = vadd.s32 %v794, 1
    %v799 = vsel %vm797, %v798, %v794
    %v800 = vadd.s32 %v795, %v799
    %v801 = vadd.s32 %v800, 536870912
    %v802 = vshrl.u32 %v801, 30
    %v803 = vshll.u32 %v802, 30
    %v804 = vsub.s32 %v800, %v803
    %vm805 = vcmp.lt.s32.totalorder %v804, 0
    %v806 = vsub.s32 0, %v804
    %v807 = vsel %vm805, %v806, %v804
    %v808 = vclz %v807
    %v809 = vsub.s32 %v808, 2
    %vm810 = vcmp.gt.s32.totalorder 0, %v809
    %v811 = vsel %vm810, 0, %v809
    %v812 = vsub.s32 32, %v811
    %v813 = vshll.u32 %v804, %v811
    %v814 = vshrl.u32 %v796, %v812
    %v815 = vor.u32 %v813, %v814
    %v816 = vsub.s32 4294967266, %v811
    %v817 = vadd.s32 %v816, 127
    %v818 = vshll.u32 %v817, 23
    %v819 = vor.u32 4788187, %v818
    %v820 = vand.u32 2147483647, %v819
    %v822 = vcvt.s32.f32 %v815
    %v823 = vmul.f32 %v822, %v820
    %v824 = vxor.u32 %v823, 2147483648
    %v825 = vsel %vm742, %v824, %v823
    %v826 = vsub.s32 4, %v802
    %v827 = vsel %vm742, %v826, %v802
    %v828 = vsel %vm741, %v628, %v825
    %v829 = vsel %vm741, 0, %v827
    %v830 = vcosq.f32.pop %v828
    %v831 = vsinq.f32.pop %v828
    %vm832 = vweird.f32 %v628
    %v833 = vand.u32 %v829, 3
    %vm834 = vcmp.lt.s32.totalorder %v833, 2
    %vm835 = vcmp.eq.s32.totalorder %v833, 0
    %v836 = vxor.u32 %v831, 2147483648
    %v837 = vsel %vm835, %v830, %v836
    %vm838 = vcmp.eq.s32.totalorder %v833, 2
    %v839 = vxor.u32 %v830, 2147483648
    %v840 = vsel %vm838, %v839, %v831
    %v841 = vsel %vm834, %v837, %v840
    %v842 = vsel %vm832, nan, %v841
    %v843 = vand.u32 2147483647, %v634
    %vm844 = vcmp.le.f32.partialorder %v843, 0.7853982
    %vm845 = vcmp.lt.s32.totalorder %v634, 0
    %v846 = vand.u32 %v634, 2139095040
    %v847 = vshrl.u32 %v846, 23
    %v848 = vsub.s32 %v847, 127
    %v849 = vand.u32 2147483647, %v634
    %v850 = vand.u32 %v849, 8388607
    %v851 = vor.u32 %v850, 8388608
    %v852 = vsub.s32 0, %v851
    %v853 = vadd.s32 %v848, 1
    %vm854 = vcmp.gt.s32.totalorder %v853, 0
    %v855 = vsel %vm854, %v853, 0
    %v856 = vshrl.u32 %v855, 5
    %v857 = vand.u32 %v855, 31
    %v858 = vsub.s32 32, %v857
    %v859 = vshrl.u32 683565275, %v858
    %v860 = vshll.u32 683565275, %v857
    %v861 = vshrl.u32 2475754826, %v858
    %v862 = vor.u32 %v860, %v861
    %v863 = vshll.u32 2475754826, %v857
    %v864 = vshrl.u32 2131351028, %v858
    %v865 = vor.u32 %v863, %v864
    %v866 = vshll.u32 2131351028, %v857
    %v867 = vshrl.u32 2102212464, %v858
    %v868 = vor.u32 %v866, %v867
    %v869 = vshll.u32 2102212464, %v857
    %v870 = vshrl.u32 920167782, %v858
    %v871 = vor.u32 %v869, %v870
    %v872 = vshll.u32 920167782, %v857
    %v873 = vshrl.u32 1326507024, %v858
    %v874 = vor.u32 %v872, %v873
    %vm875 = vcmp.lt.s32.totalorder %v856, 1
    %vm876 = vcmp.lt.s32.totalorder %v856, 2
    %vm877 = vcmp.lt.s32.totalorder %v856, 3
    %vm878 = vcmp.lt.s32.totalorder %v856, 4
    %v879 = vsel %vm875, %v859, %v862
    %v880 = vsel %vm878, %v868, 2102212464
    %v881 = vsel %vm877, %v865, %v880
    %v882 = vsel %vm876, %v879, %v881
    %v883 = vsel %vm875, %v862, %v865
    %v884 = vsel %vm878, %v871, 920167782
    %v885 = vsel %vm877, %v868, %v884
    %v886 = vsel %vm876, %v883, %v885
    %v887 = vsel %vm875, %v865, %v868
    %v888 = vsel %vm878, %v874, 1326507024
    %v889 = vsel %vm877, %v871, %v888
    %v890 = vsel %vm876, %v887, %v889
    %v891 = vshll.u32 %v851, 8
    %v892 = vmul.u32.u64.compose %v891, %v890
    %v893 = vextract.low.u32 %v892
    %v894 = vextract.high.u32 %v892
    %v895 = vmul.u32.u64.compose %v891, %v886
    %v896 = vextract.low.u32 %v895
    %v897 = vextract.high.u32 %v895
    %v898 = vmul.u32 %v891, %v882
    %v899 = vadd.s32 %v894, %v896
    %vm900 = vc.u32 %v894, %v896
    %v901 = vadd.s32 %v897, 1
    %v902 = vsel %vm900, %v901, %v897
    %v903 = vadd.s32 %v898, %v902
    %v904 = vadd.s32 %v903, 536870912
    %v905 = vshrl.u32 %v904, 30
    %v906 = vshll.u32 %v905, 30
    %v907 = vsub.s32 %v903, %v906
    %vm908 = vcmp.lt.s32.totalorder %v907, 0
    %v909 = vsub.s32 0, %v907
    %v910 = vsel %vm908, %v909, %v907
    %v911 = vclz %v910
    %v912 = vsub.s32 %v911, 2
    %vm913 = vcmp.gt.s32.totalorder 0, %v912
    %v914 = vsel %vm913, 0, %v912
    %v915 = vsub.s32 32, %v914
    %v916 = vshll.u32 %v907, %v914
    %v917 = vshrl.u32 %v899, %v915
    %v918 = vor.u32 %v916, %v917
    %v919 = vsub.s32 4294967266, %v914
    %v920 = vadd.s32 %v919, 127
    %v921 = vshll.u32 %v920, 23
    %v922 = vor.u32 4788187, %v921
    %v923 = vand.u32 2147483647, %v922
    %v925 = vcvt.s32.f32 %v918
    %v926 = vmul.f32 %v925, %v923
    %v927 = vxor.u32 %v926, 2147483648
    %v928 = vsel %vm845, %v927, %v926
    %v929 = vsub.s32 4, %v905
    %v930 = vsel %vm845, %v929, %v905
    %v931 = vsel %vm844, %v634, %v928
    %v932 = vsel %vm844, 0, %v930
    %v933 = vcosq.f32.pop %v931
    %v934 = vsinq.f32.pop %v931
    %vm935 = vweird.f32 %v634
    %v936 = vand.u32 %v932, 3
    %vm937 = vcmp.lt.s32.totalorder %v936, 2
    %vm938 = vcmp.eq.s32.totalorder %v936, 0
    %v939 = vxor.u32 %v934, 2147483648
    %v940 = vsel %vm938, %v933, %v939
    %vm941 = vcmp.eq.s32.totalorder %v936, 2
    %v942 = vxor.u32 %v933, 2147483648
    %v943 = vsel %vm941, %v942, %v934
    %v944 = vsel %vm937, %v940, %v943
    %v945 = vsel %vm935, nan, %v944
    %v946 = vpack.c.bf16 %v842, %v739
    %v947 = vpack.c.bf16 %v945, %v945
    %v948 = vand.u32 2147483647, %v622
    %vm949 = vcmp.le.f32.partialorder %v948, 0.7853982
    %vm950 = vcmp.lt.s32.totalorder %v622, 0
    %v951 = vand.u32 %v622, 2139095040
    %v952 = vshrl.u32 %v951, 23
    %v953 = vsub.s32 %v952, 127
    %v954 = vand.u32 2147483647, %v622
    %v955 = vand.u32 %v954, 8388607
    %v956 = vor.u32 %v955, 8388608
    %v957 = vsub.s32 0, %v956
    %v958 = vadd.s32 %v953, 1
    %vm959 = vcmp.gt.s32.totalorder %v958, 0
    %v960 = vsel %vm959, %v958, 0
    %v961 = vshrl.u32 %v960, 5
    %v962 = vand.u32 %v960, 31
    %v963 = vsub.s32 32, %v962
    %v964 = vshrl.u32 683565275, %v963
    %v965 = vshll.u32 683565275, %v962
    %v966 = vshrl.u32 2475754826, %v963
    %v967 = vor.u32 %v965, %v966
    %v968 = vshll.u32 2475754826, %v962
    %v969 = vshrl.u32 2131351028, %v963
    %v970 = vor.u32 %v968, %v969
    %v971 = vshll.u32 2131351028, %v962
    %v972 = vshrl.u32 2102212464, %v963
    %v973 = vor.u32 %v971, %v972
    %v974 = vshll.u32 2102212464, %v962
    %v975 = vshrl.u32 920167782, %v963
    %v976 = vor.u32 %v974, %v975
    %v977 = vshll.u32 920167782, %v962
    %v978 = vshrl.u32 1326507024, %v963
    %v979 = vor.u32 %v977, %v978
    %vm980 = vcmp.lt.s32.totalorder %v961, 1
    %vm981 = vcmp.lt.s32.totalorder %v961, 2
    %vm982 = vcmp.lt.s32.totalorder %v961, 3
    %vm983 = vcmp.lt.s32.totalorder %v961, 4
    %v984 = vsel %vm980, %v964, %v967
    %v985 = vsel %vm983, %v973, 2102212464
    %v986 = vsel %vm982, %v970, %v985
    %v987 = vsel %vm981, %v984, %v986
    %v988 = vsel %vm980, %v967, %v970
    %v989 = vsel %vm983, %v976, 920167782
    %v990 = vsel %vm982, %v973, %v989
    %v991 = vsel %vm981, %v988, %v990
    %v992 = vsel %vm980, %v970, %v973
    %v993 = vsel %vm983, %v979, 1326507024
    %v994 = vsel %vm982, %v976, %v993
    %v995 = vsel %vm981, %v992, %v994
    %v996 = vshll.u32 %v956, 8
    %v997 = vmul.u32.u64.compose %v996, %v995
    %v998 = vextract.low.u32 %v997
    %v999 = vextract.high.u32 %v997
    %v1000 = vmul.u32.u64.compose %v996, %v991
    %v1001 = vextract.low.u32 %v1000
    %v1002 = vextract.high.u32 %v1000
    %v1003 = vmul.u32 %v996, %v987
    %v1004 = vadd.s32 %v999, %v1001
    %vm1005 = vc.u32 %v999, %v1001
    %v1006 = vadd.s32 %v1002, 1
    %v1007 = vsel %vm1005, %v1006, %v1002
    %v1008 = vadd.s32 %v1003, %v1007
    %v1009 = vadd.s32 %v1008, 536870912
    %v1010 = vshrl.u32 %v1009, 30
    %v1011 = vshll.u32 %v1010, 30
    %v1012 = vsub.s32 %v1008, %v1011
    %vm1013 = vcmp.lt.s32.totalorder %v1012, 0
    %v1014 = vsub.s32 0, %v1012
    %v1015 = vsel %vm1013, %v1014, %v1012
    %v1016 = vclz %v1015
    %v1017 = vsub.s32 %v1016, 2
    %vm1018 = vcmp.gt.s32.totalorder 0, %v1017
    %v1019 = vsel %vm1018, 0, %v1017
    %v1020 = vsub.s32 32, %v1019
    %v1021 = vshll.u32 %v1012, %v1019
    %v1022 = vshrl.u32 %v1004, %v1020
    %v1023 = vor.u32 %v1021, %v1022
    %v1024 = vsub.s32 4294967266, %v1019
    %v1025 = vadd.s32 %v1024, 127
    %v1026 = vshll.u32 %v1025, 23
    %v1027 = vor.u32 4788187, %v1026
    %v1028 = vand.u32 2147483647, %v1027
    %v1030 = vcvt.s32.f32 %v1023
    %v1031 = vmul.f32 %v1030, %v1028
    %v1032 = vxor.u32 %v1031, 2147483648
    %v1033 = vsel %vm950, %v1032, %v1031
    %v1034 = vsub.s32 4, %v1010
    %v1035 = vsel %vm950, %v1034, %v1010
    %v1036 = vsel %vm949, %v622, %v1033
    %v1037 = vsel %vm949, 0, %v1035
    %v1038 = vcosq.f32.pop %v1036
    %v1039 = vsinq.f32.pop %v1036
    %vm1040 = vweird.f32 %v622
    %v1041 = vadd.s32 %v1037, 3
    %v1042 = vand.u32 %v1041, 3
    %vm1043 = vcmp.lt.s32.totalorder %v1042, 2
    %vm1044 = vcmp.eq.s32.totalorder %v1042, 0
    %v1045 = vxor.u32 %v1039, 2147483648
    %v1046 = vsel %vm1044, %v1038, %v1045
    %vm1047 = vcmp.eq.s32.totalorder %v1042, 2
    %v1048 = vxor.u32 %v1038, 2147483648
    %v1049 = vsel %vm1047, %v1048, %v1039
    %v1050 = vsel %vm1043, %v1046, %v1049
    %v1051 = vsel %vm1040, nan, %v1050
    %v1052 = vand.u32 2147483647, %v628
    %vm1053 = vcmp.le.f32.partialorder %v1052, 0.7853982
    %vm1054 = vcmp.lt.s32.totalorder %v628, 0
    %v1055 = vand.u32 %v628, 2139095040
    %v1056 = vshrl.u32 %v1055, 23
    %v1057 = vsub.s32 %v1056, 127
    %v1058 = vand.u32 2147483647, %v628
    %v1059 = vand.u32 %v1058, 8388607
    %v1060 = vor.u32 %v1059, 8388608
    %v1061 = vsub.s32 0, %v1060
    %v1062 = vadd.s32 %v1057, 1
    %vm1063 = vcmp.gt.s32.totalorder %v1062, 0
    %v1064 = vsel %vm1063, %v1062, 0
    %v1065 = vshrl.u32 %v1064, 5
    %v1066 = vand.u32 %v1064, 31
    %v1067 = vsub.s32 32, %v1066
    %v1068 = vshrl.u32 683565275, %v1067
    %v1069 = vshll.u32 683565275, %v1066
    %v1070 = vshrl.u32 2475754826, %v1067
    %v1071 = vor.u32 %v1069, %v1070
    %v1072 = vshll.u32 2475754826, %v1066
    %v1073 = vshrl.u32 2131351028, %v1067
    %v1074 = vor.u32 %v1072, %v1073
    %v1075 = vshll.u32 2131351028, %v1066
    %v1076 = vshrl.u32 2102212464, %v1067
    %v1077 = vor.u32 %v1075, %v1076
    %v1078 = vshll.u32 2102212464, %v1066
    %v1079 = vshrl.u32 920167782, %v1067
    %v1080 = vor.u32 %v1078, %v1079
    %v1081 = vshll.u32 920167782, %v1066
    %v1082 = vshrl.u32 1326507024, %v1067
    %v1083 = vor.u32 %v1081, %v1082
    %vm1084 = vcmp.lt.s32.totalorder %v1065, 1
    %vm1085 = vcmp.lt.s32.totalorder %v1065, 2
    %vm1086 = vcmp.lt.s32.totalorder %v1065, 3
    %vm1087 = vcmp.lt.s32.totalorder %v1065, 4
    %v1088 = vsel %vm1084, %v1068, %v1071
    %v1089 = vsel %vm1087, %v1077, 2102212464
    %v1090 = vsel %vm1086, %v1074, %v1089
    %v1091 = vsel %vm1085, %v1088, %v1090
    %v1092 = vsel %vm1084, %v1071, %v1074
    %v1093 = vsel %vm1087, %v1080, 920167782
    %v1094 = vsel %vm1086, %v1077, %v1093
    %v1095 = vsel %vm1085, %v1092, %v1094
    %v1096 = vsel %vm1084, %v1074, %v1077
    %v1097 = vsel %vm1087, %v1083, 1326507024
    %v1098 = vsel %vm1086, %v1080, %v1097
    %v1099 = vsel %vm1085, %v1096, %v1098
    %v1100 = vshll.u32 %v1060, 8
    %v1101 = vmul.u32.u64.compose %v1100, %v1099
    %v1102 = vextract.low.u32 %v1101
    %v1103 = vextract.high.u32 %v1101
    %v1104 = vmul.u32.u64.compose %v1100, %v1095
    %v1105 = vextract.low.u32 %v1104
    %v1106 = vextract.high.u32 %v1104
    %v1107 = vmul.u32 %v1100, %v1091
    %v1108 = vadd.s32 %v1103, %v1105
    %vm1109 = vc.u32 %v1103, %v1105
    %v1110 = vadd.s32 %v1106, 1
    %v1111 = vsel %vm1109, %v1110, %v1106
    %v1112 = vadd.s32 %v1107, %v1111
    %v1113 = vadd.s32 %v1112, 536870912
    %v1114 = vshrl.u32 %v1113, 30
    %v1115 = vshll.u32 %v1114, 30
    %v1116 = vsub.s32 %v1112, %v1115
    %vm1117 = vcmp.lt.s32.totalorder %v1116, 0
    %v1118 = vsub.s32 0, %v1116
    %v1119 = vsel %vm1117, %v1118, %v1116
    %v1120 = vclz %v1119
    %v1121 = vsub.s32 %v1120, 2
    %vm1122 = vcmp.gt.s32.totalorder 0, %v1121
    %v1123 = vsel %vm1122, 0, %v1121
    %v1124 = vsub.s32 32, %v1123
    %v1125 = vshll.u32 %v1116, %v1123
    %v1126 = vshrl.u32 %v1108, %v1124
    %v1127 = vor.u32 %v1125, %v1126
    %v1128 = vsub.s32 4294967266, %v1123
    %v1129 = vadd.s32 %v1128, 127
    %v1130 = vshll.u32 %v1129, 23
    %v1131 = vor.u32 4788187, %v1130
    %v1132 = vand.u32 2147483647, %v1131
    %v1134 = vcvt.s32.f32 %v1127
    %v1135 = vmul.f32 %v1134, %v1132
    %v1136 = vxor.u32 %v1135, 2147483648
    %v1137 = vsel %vm1054, %v1136, %v1135
    %v1138 = vsub.s32 4, %v1114
    %v1139 = vsel %vm1054, %v1138, %v1114
    %v1140 = vsel %vm1053, %v628, %v1137
    %v1141 = vsel %vm1053, 0, %v1139
    %v1142 = vcosq.f32.pop %v1140
    %v1143 = vsinq.f32.pop %v1140
    %vm1144 = vweird.f32 %v628
    %v1145 = vadd.s32 %v1141, 3
    %v1146 = vand.u32 %v1145, 3
    %vm1147 = vcmp.lt.s32.totalorder %v1146, 2
    %vm1148 = vcmp.eq.s32.totalorder %v1146, 0
    %v1149 = vxor.u32 %v1143, 2147483648
    %v1150 = vsel %vm1148, %v1142, %v1149
    %vm1151 = vcmp.eq.s32.totalorder %v1146, 2
    %v1152 = vxor.u32 %v1142, 2147483648
    %v1153 = vsel %vm1151, %v1152, %v1143
    %v1154 = vsel %vm1147, %v1150, %v1153
    %v1155 = vsel %vm1144, nan, %v1154
    %v1156 = vand.u32 2147483647, %v634
    %vm1157 = vcmp.le.f32.partialorder %v1156, 0.7853982
    %vm1158 = vcmp.lt.s32.totalorder %v634, 0
    %v1159 = vand.u32 %v634, 2139095040
    %v1160 = vshrl.u32 %v1159, 23
    %v1161 = vsub.s32 %v1160, 127
    %v1162 = vand.u32 2147483647, %v634
    %v1163 = vand.u32 %v1162, 8388607
    %v1164 = vor.u32 %v1163, 8388608
    %v1165 = vsub.s32 0, %v1164
    %v1166 = vadd.s32 %v1161, 1
    %vm1167 = vcmp.gt.s32.totalorder %v1166, 0
    %v1168 = vsel %vm1167, %v1166, 0
    %v1169 = vshrl.u32 %v1168, 5
    %v1170 = vand.u32 %v1168, 31
    %v1171 = vsub.s32 32, %v1170
    %v1172 = vshrl.u32 683565275, %v1171
    %v1173 = vshll.u32 683565275, %v1170
    %v1174 = vshrl.u32 2475754826, %v1171
    %v1175 = vor.u32 %v1173, %v1174
    %v1176 = vshll.u32 2475754826, %v1170
    %v1177 = vshrl.u32 2131351028, %v1171
    %v1178 = vor.u32 %v1176, %v1177
    %v1179 = vshll.u32 2131351028, %v1170
    %v1180 = vshrl.u32 2102212464, %v1171
    %v1181 = vor.u32 %v1179, %v1180
    %v1182 = vshll.u32 2102212464, %v1170
    %v1183 = vshrl.u32 920167782, %v1171
    %v1184 = vor.u32 %v1182, %v1183
    %v1185 = vshll.u32 920167782, %v1170
    %v1186 = vshrl.u32 1326507024, %v1171
    %v1187 = vor.u32 %v1185, %v1186
    %vm1188 = vcmp.lt.s32.totalorder %v1169, 1
    %vm1189 = vcmp.lt.s32.totalorder %v1169, 2
    %vm1190 = vcmp.lt.s32.totalorder %v1169, 3
    %vm1191 = vcmp.lt.s32.totalorder %v1169, 4
    %v1192 = vsel %vm1188, %v1172, %v1175
    %v1193 = vsel %vm1191, %v1181, 2102212464
    %v1194 = vsel %vm1190, %v1178, %v1193
    %v1195 = vsel %vm1189, %v1192, %v1194
    %v1196 = vsel %vm1188, %v1175, %v1178
    %v1197 = vsel %vm1191, %v1184, 920167782
    %v1198 = vsel %vm1190, %v1181, %v1197
    %v1199 = vsel %vm1189, %v1196, %v1198
    %v1200 = vsel %vm1188, %v1178, %v1181
    %v1201 = vsel %vm1191, %v1187, 1326507024
    %v1202 = vsel %vm1190, %v1184, %v1201
    %v1203 = vsel %vm1189, %v1200, %v1202
    %v1204 = vshll.u32 %v1164, 8
    %v1205 = vmul.u32.u64.compose %v1204, %v1203
    %v1206 = vextract.low.u32 %v1205
    %v1207 = vextract.high.u32 %v1205
    %v1208 = vmul.u32.u64.compose %v1204, %v1199
    %v1209 = vextract.low.u32 %v1208
    %v1210 = vextract.high.u32 %v1208
    %v1211 = vmul.u32 %v1204, %v1195
    %v1212 = vadd.s32 %v1207, %v1209
    %vm1213 = vc.u32 %v1207, %v1209
    %v1214 = vadd.s32 %v1210, 1
    %v1215 = vsel %vm1213, %v1214, %v1210
    %v1216 = vadd.s32 %v1211, %v1215
    %v1217 = vadd.s32 %v1216, 536870912
    %v1218 = vshrl.u32 %v1217, 30
    %v1219 = vshll.u32 %v1218, 30
    %v1220 = vsub.s32 %v1216, %v1219
    %vm1221 = vcmp.lt.s32.totalorder %v1220, 0
    %v1222 = vsub.s32 0, %v1220
    %v1223 = vsel %vm1221, %v1222, %v1220
    %v1224 = vclz %v1223
    %v1225 = vsub.s32 %v1224, 2
    %vm1226 = vcmp.gt.s32.totalorder 0, %v1225
    %v1227 = vsel %vm1226, 0, %v1225
    %v1228 = vsub.s32 32, %v1227
    %v1229 = vshll.u32 %v1220, %v1227
    %v1230 = vshrl.u32 %v1212, %v1228
    %v1231 = vor.u32 %v1229, %v1230
    %v1232 = vsub.s32 4294967266, %v1227
    %v1233 = vadd.s32 %v1232, 127
    %v1234 = vshll.u32 %v1233, 23
    %v1235 = vor.u32 4788187, %v1234
    %v1236 = vand.u32 2147483647, %v1235
    %v1238 = vcvt.s32.f32 %v1231
    %v1239 = vmul.f32 %v1238, %v1236
    %v1240 = vxor.u32 %v1239, 2147483648
    %v1241 = vsel %vm1158, %v1240, %v1239
    %v1242 = vsub.s32 4, %v1218
    %v1243 = vsel %vm1158, %v1242, %v1218
    %v1244 = vsel %vm1157, %v634, %v1241
    %v1245 = vsel %vm1157, 0, %v1243
    %v1246 = vcosq.f32.pop %v1244
    %v1247 = vsinq.f32.pop %v1244
    %vm1248 = vweird.f32 %v634
    %v1249 = vadd.s32 %v1245, 3
    %v1250 = vand.u32 %v1249, 3
    %vm1251 = vcmp.lt.s32.totalorder %v1250, 2
    %vm1252 = vcmp.eq.s32.totalorder %v1250, 0
    %v1253 = vxor.u32 %v1247, 2147483648
    %v1254 = vsel %vm1252, %v1246, %v1253
    %vm1255 = vcmp.eq.s32.totalorder %v1250, 2
    %v1256 = vxor.u32 %v1246, 2147483648
    %v1257 = vsel %vm1255, %v1256, %v1247
    %v1258 = vsel %vm1251, %v1254, %v1257
    %v1259 = vsel %vm1248, nan, %v1258
    %v1260 = vpack.c.bf16 %v1155, %v1051
    %v1261 = vpack.c.bf16 %v1259, %v1259
    %v1262 = vld [vmem:[%s2] sm:$0xf]
    %v1263 = vld [vmem:[%s2 + $0x4] sm:$0xf]
    %v1264 = vld [vmem:[%s2 + $0x8] sm:$0xf]
    %v1265 = vld [vmem:[%s2 + $0xc] sm:$0xf]
    %v1266 = vld [vmem:[%s3] sm:$0xf]
    %v1267 = vld [vmem:[%s3 + $0x4] sm:$0xf]
    %v1268 = vld [vmem:[%s3 + $0x8] sm:$0xf]
    %v1269 = vld [vmem:[%s3 + $0xc] sm:$0xf]
    %v1274 = vunpack.c.l.b16 %v1266
    %v1275 = vunpack.c.l.b16 %v1267
    %v1276 = vunpack.c.l.b16 %v1268
    %v1277 = vunpack.c.l.b16 %v1269
    %v1278 = vpack.c.b16 %v1275, %v1274
    %v1279 = vpack.c.b16 %v1277, %v1276
    %vm1282 = vcmask 261120
    %v1284 = vsel %vm1282, %v1260, 0
    %v1287 = vsel %vm1282, %v1261, 0
    %1289 = vmatprep.subr.bf16.mxu0 0
    %1290 = vmatpush1.bf16.msra.mxu0 %v1278
    %1291 = vmatprep.subr.bf16.mxu0 0
    %1292 = vmatpush1.bf16.msra.mxu0 %v1279
    %1293 = vmatprep.subr.bf16.mxu0 0
    %1294 = vmatpush1.bf16.msra.mxu0 0
    %1295 = vmatprep.subr.bf16.mxu0 0
    %1296 = vmatpush1.bf16.msra.mxu0 0
    %1297 = vmatprep.subr.bf16.mxu0 0
    %1298 = vmatpush1.bf16.msra.mxu0 0
    %1299 = vmatprep.subr.bf16.mxu0 0
    %1300 = vmatpush1.bf16.msra.mxu0 0
    %1301 = vmatprep.subr.bf16.mxu0 0
    %1302 = vmatpush1.bf16.msra.mxu0 0
    %1303 = vmatprep.subr.bf16.mxu0 0
    %1304 = vmatpush1.bf16.msra.mxu0 0
    %1305 = vmatprep.subr.bf16.mxu0 0
    %1306 = vmatpush1.bf16.msra.mxu0 0
    %1307 = vmatprep.subr.bf16.mxu0 0
    %1308 = vmatpush1.bf16.msra.mxu0 0
    %1309 = vmatprep.subr.bf16.mxu0 0
    %1310 = vmatpush1.bf16.msra.mxu0 0
    %1311 = vmatprep.subr.bf16.mxu0 0
    %1312 = vmatpush1.bf16.msra.mxu0 0
    %1313 = vmatprep.subr.bf16.mxu0 0
    %1314 = vmatpush1.bf16.msra.mxu0 0
    %1315 = vmatprep.subr.bf16.mxu0 0
    %1316 = vmatpush1.bf16.msra.mxu0 0
    %1317 = vmatprep.subr.bf16.mxu0 0
    %1318 = vmatpush1.bf16.msra.mxu0 0
    %1319 = vmatprep.subr.bf16.mxu0 0
    %1320 = vmatpush1.bf16.msra.mxu0 0
    %1321 = vmatprep.mubr.bf16.mxu0 0
    %1322 = vmatmul.mubr.bf16.gmra.mrb[0].mxu0 %v1284
    %v1323 = vpop.f32.mrb[0].mxu0
    %v1324 = vadd.f32 0.0, %v1323
    %v1325 = vpop.f32.mrb[0].mxu0
    %v1326 = vpop.f32.mrb[0].mxu0
    %v1327 = vadd.f32 0.0, %v1326
    %v1328 = vpop.f32.mrb[0].mxu0
    %1329 = vmatprep.mubr.bf16.mxu0 0
    %1330 = vmatmul.mubr.bf16.gmra.mrb[0].mxu0 %v1287
    %v1331 = vpop.f32.mrb[0].mxu0
    %v1332 = vadd.f32 0.0, %v1331
    %v1333 = vpop.f32.mrb[0].mxu0
    %v1334 = vpop.f32.mrb[0].mxu0
    %v1335 = vpop.f32.mrb[0].mxu0
    %1336 = vdwg.mxu0
    %v1341 = vunpack.c.l.b16 %v1262
    %v1342 = vunpack.c.l.b16 %v1263
    %v1343 = vunpack.c.l.b16 %v1264
    %v1344 = vunpack.c.l.b16 %v1265
    %v1345 = vpack.c.b16 %v1342, %v1341
    %v1346 = vpack.c.b16 %v1344, %v1343
    %v1350 = vsel %vm1282, %v946, 0
    %v1353 = vsel %vm1282, %v947, 0
    %1355 = vmatprep.subr.bf16.mxu0 0
    %1356 = vmatpush1.bf16.msra.mxu0 %v1345
    %1357 = vmatprep.subr.bf16.mxu0 0
    %1358 = vmatpush1.bf16.msra.mxu0 %v1346
    %1359 = vmatprep.subr.bf16.mxu0 0
    %1360 = vmatpush1.bf16.msra.mxu0 0
    %1361 = vmatprep.subr.bf16.mxu0 0
    %1362 = vmatpush1.bf16.msra.mxu0 0
    %1363 = vmatprep.subr.bf16.mxu0 0
    %1364 = vmatpush1.bf16.msra.mxu0 0
    %1365 = vmatprep.subr.bf16.mxu0 0
    %1366 = vmatpush1.bf16.msra.mxu0 0
    %1367 = vmatprep.subr.bf16.mxu0 0
    %1368 = vmatpush1.bf16.msra.mxu0 0
    %1369 = vmatprep.subr.bf16.mxu0 0
    %1370 = vmatpush1.bf16.msra.mxu0 0
    %1371 = vmatprep.subr.bf16.mxu0 0
    %1372 = vmatpush1.bf16.msra.mxu0 0
    %1373 = vmatprep.subr.bf16.mxu0 0
    %1374 = vmatpush1.bf16.msra.mxu0 0
    %1375 = vmatprep.subr.bf16.mxu0 0
    %1376 = vmatpush1.bf16.msra.mxu0 0
    %1377 = vmatprep.subr.bf16.mxu0 0
    %1378 = vmatpush1.bf16.msra.mxu0 0
    %1379 = vmatprep.subr.bf16.mxu0 0
    %1380 = vmatpush1.bf16.msra.mxu0 0
    %1381 = vmatprep.subr.bf16.mxu0 0
    %1382 = vmatpush1.bf16.msra.mxu0 0
    %1383 = vmatprep.subr.bf16.mxu0 0
    %1384 = vmatpush1.bf16.msra.mxu0 0
    %1385 = vmatprep.subr.bf16.mxu0 0
    %1386 = vmatpush1.bf16.msra.mxu0 0
    %1387 = vmatprep.mubr.bf16.mxu0 0
    %1388 = vmatmul.mubr.bf16.gmra.mrb[0].mxu0 %v1350
    %v1389 = vpop.f32.mrb[0].mxu0
    %v1390 = vadd.f32 %v1324, %v1389
    %v1391 = vpop.f32.mrb[0].mxu0
    %v1392 = vpop.f32.mrb[0].mxu0
    %v1393 = vadd.f32 %v1327, %v1392
    %v1394 = vpop.f32.mrb[0].mxu0
    %1395 = vmatprep.mubr.bf16.mxu0 0
    %1396 = vmatmul.mubr.bf16.gmra.mrb[0].mxu0 %v1353
    %v1397 = vpop.f32.mrb[0].mxu0
    %v1398 = vadd.f32 %v1332, %v1397
    %v1399 = vpop.f32.mrb[0].mxu0
    %v1400 = vpop.f32.mrb[0].mxu0
    %v1401 = vpop.f32.mrb[0].mxu0
    %1402 = vdwg.mxu0
    %v1403 = vpack.c.bf16 %v88, %v87
    %v1404 = vpack.c.bf16 %v89, %v89
    %v1405 = vld [vmem:[%s4] sm:$0x3]
    %v1407 = vsel %vm91, %v1403, 0
    %v1410 = vsel %vm91, %v1404, 0
    %vm1412 = vcmask 1041408
    %v1414 = vsel %vm1412, %v1405, 0
    %1416 = vmatprep.subr.bf16.mxu0 0
    %1417 = vmatpush1.bf16.msra.mxu0 %v1414
    %1418 = vmatprep.subr.bf16.mxu0 0
    %1419 = vmatpush1.bf16.msra.mxu0 0
    %1420 = vmatprep.subr.bf16.mxu0 0
    %1421 = vmatpush1.bf16.msra.mxu0 0
    %1422 = vmatprep.subr.bf16.mxu0 0
    %1423 = vmatpush1.bf16.msra.mxu0 0
    %1424 = vmatprep.subr.bf16.mxu0 0
    %1425 = vmatpush1.bf16.msra.mxu0 0
    %1426 = vmatprep.subr.bf16.mxu0 0
    %1427 = vmatpush1.bf16.msra.mxu0 0
    %1428 = vmatprep.subr.bf16.mxu0 0
    %1429 = vmatpush1.bf16.msra.mxu0 0
    %1430 = vmatprep.subr.bf16.mxu0 0
    %1431 = vmatpush1.bf16.msra.mxu0 0
    %1432 = vmatprep.subr.bf16.mxu0 0
    %1433 = vmatpush1.bf16.msra.mxu0 0
    %1434 = vmatprep.subr.bf16.mxu0 0
    %1435 = vmatpush1.bf16.msra.mxu0 0
    %1436 = vmatprep.subr.bf16.mxu0 0
    %1437 = vmatpush1.bf16.msra.mxu0 0
    %1438 = vmatprep.subr.bf16.mxu0 0
    %1439 = vmatpush1.bf16.msra.mxu0 0
    %1440 = vmatprep.subr.bf16.mxu0 0
    %1441 = vmatpush1.bf16.msra.mxu0 0
    %1442 = vmatprep.subr.bf16.mxu0 0
    %1443 = vmatpush1.bf16.msra.mxu0 0
    %1444 = vmatprep.subr.bf16.mxu0 0
    %1445 = vmatpush1.bf16.msra.mxu0 0
    %1446 = vmatprep.subr.bf16.mxu0 0
    %1447 = vmatpush1.bf16.msra.mxu0 0
    %1448 = vmatprep.mubr.bf16.mxu0 0
    %1449 = vmatmul.mubr.bf16.gmra.mrb[0].mxu0 %v1407
    %v1450 = vpop.f32.mrb[0].mxu0
    %v1451 = vadd.f32 0.0, %v1450
    %v1452 = vpop.f32.mrb[0].mxu0
    %v1453 = vpop.f32.mrb[0].mxu0
    %v1454 = vadd.f32 0.0, %v1453
    %v1455 = vpop.f32.mrb[0].mxu0
    %1456 = vmatprep.mubr.bf16.mxu0 0
    %1457 = vmatmul.mubr.bf16.gmra.mrb[0].mxu0 %v1410
    %v1458 = vpop.f32.mrb[0].mxu0
    %v1459 = vadd.f32 0.0, %v1458
    %v1460 = vpop.f32.mrb[0].mxu0
    %v1461 = vpop.f32.mrb[0].mxu0
    %v1462 = vpop.f32.mrb[0].mxu0
    %1463 = vdwg.mxu0
    %v1464 = vadd.f32 %v1390, %v1451
    %v1465 = vadd.f32 %v1393, %v1454
    %v1466 = vadd.f32 %v1398, %v1459
    %v1467 = vld [vmem:[#allocation5] sm:$0x1]
    %v1469 = vlaneseq
    %v1470 = vshrl.u32 %v1469, 7
    %v1471 = vsub.s32 0, %v1470
    %v1472 = vrot.slane %v1467, %v1471
    %v1474 = vadd.f32 %v1464, %v1472
    %v1475 = vadd.f32 %v1465, %v1472
    %v1476 = vadd.f32 %v1466, %v1472
    %v1477 = vpack.c.bf16 %v1475, %v1474
    %v1478 = vpack.c.bf16 %v1476, %v1476
    %v1479 = vld [vmem:[%s8] sm:$0xf]
    %v1480 = vld [vmem:[%s8 + $0x4] sm:$0xf]
    %v1481 = vld [vmem:[%s8 + $0x8] sm:$0xf]
    %v1482 = vld [vmem:[%s8 + $0xc] sm:$0xf]
    %v1483 = vld [vmem:[%s8 + $0x10] sm:$0xf]
    %v1484 = vld [vmem:[%s8 + $0x14] sm:$0xf]
    %v1485 = vld [vmem:[%s8 + $0x18] sm:$0xf]
    %v1486 = vld [vmem:[%s8 + $0x1c] sm:$0xf]
    %v1487 = vld [vmem:[%s8 + $0x20] sm:$0xf]
    %v1488 = vld [vmem:[%s8 + $0x24] sm:$0xf]
    %v1489 = vld [vmem:[%s8 + $0x28] sm:$0xf]
    %v1490 = vld [vmem:[%s8 + $0x2c] sm:$0xf]
    %v1491 = vld [vmem:[%s8 + $0x30] sm:$0xf]
    %v1492 = vld [vmem:[%s8 + $0x34] sm:$0xf]
    %v1493 = vld [vmem:[%s8 + $0x38] sm:$0xf]
    %v1494 = vld [vmem:[%s8 + $0x3c] sm:$0xf]
    %v1511 = vunpack.c.l.b16 %v1479
    %v1512 = vunpack.c.l.b16 %v1480
    %v1513 = vunpack.c.l.b16 %v1481
    %v1514 = vunpack.c.l.b16 %v1482
    %v1515 = vunpack.c.l.b16 %v1483
    %v1516 = vunpack.c.l.b16 %v1484
    %v1517 = vunpack.c.l.b16 %v1485
    %v1518 = vunpack.c.l.b16 %v1486
    %v1519 = vunpack.c.l.b16 %v1487
    %v1520 = vunpack.c.l.b16 %v1488
    %v1521 = vunpack.c.l.b16 %v1489
    %v1522 = vunpack.c.l.b16 %v1490
    %v1523 = vunpack.c.l.b16 %v1491
    %v1524 = vunpack.c.l.b16 %v1492
    %v1525 = vunpack.c.l.b16 %v1493
    %v1526 = vunpack.c.l.b16 %v1494
    %v1527 = vpack.c.b16 %v1512, %v1511
    %v1528 = vpack.c.b16 %v1514, %v1513
    %v1529 = vpack.c.b16 %v1516, %v1515
    %v1530 = vpack.c.b16 %v1518, %v1517
    %v1531 = vpack.c.b16 %v1520, %v1519
    %v1532 = vpack.c.b16 %v1522, %v1521
    %v1533 = vpack.c.b16 %v1524, %v1523
    %v1534 = vpack.c.b16 %v1526, %v1525
    %1543 = vmatprep.subr.bf16.mxu0 0
    %1544 = vmatpush1.bf16.msra.mxu0 %v1527
    %1545 = vmatprep.subr.bf16.mxu0 0
    %1546 = vmatpush1.bf16.msra.mxu0 %v1528
    %1547 = vmatprep.subr.bf16.mxu0 0
    %1548 = vmatpush1.bf16.msra.mxu0 %v1529
    %1549 = vmatprep.subr.bf16.mxu0 0
    %1550 = vmatpush1.bf16.msra.mxu0 %v1530
    %1551 = vmatprep.subr.bf16.mxu0 0
    %1552 = vmatpush1.bf16.msra.mxu0 %v1531
    %1553 = vmatprep.subr.bf16.mxu0 0
    %1554 = vmatpush1.bf16.msra.mxu0 %v1532
    %1555 = vmatprep.subr.bf16.mxu0 0
    %1556 = vmatpush1.bf16.msra.mxu0 %v1533
    %1557 = vmatprep.subr.bf16.mxu0 0
    %1558 = vmatpush1.bf16.msra.mxu0 %v1534
    %1559 = vmatprep.subr.bf16.mxu0 0
    %1560 = vmatpush1.bf16.msra.mxu0 0
    %1561 = vmatprep.subr.bf16.mxu0 0
    %1562 = vmatpush1.bf16.msra.mxu0 0
    %1563 = vmatprep.subr.bf16.mxu0 0
    %1564 = vmatpush1.bf16.msra.mxu0 0
    %1565 = vmatprep.subr.bf16.mxu0 0
    %1566 = vmatpush1.bf16.msra.mxu0 0
    %1567 = vmatprep.subr.bf16.mxu0 0
    %1568 = vmatpush1.bf16.msra.mxu0 0
    %1569 = vmatprep.subr.bf16.mxu0 0
    %1570 = vmatpush1.bf16.msra.mxu0 0
    %1571 = vmatprep.subr.bf16.mxu0 0
    %1572 = vmatpush1.bf16.msra.mxu0 0
    %1573 = vmatprep.subr.bf16.mxu0 0
    %1574 = vmatpush1.bf16.msra.mxu0 0
    %1575 = vmatprep.mubr.bf16.mxu0 0
    %1576 = vmatmul.mubr.bf16.gmra.mrb[0].mxu0 %v1477
    %v1577 = vpop.f32.mrb[0].mxu0
    %v1578 = vadd.f32 0.0, %v1577
    %v1579 = vpop.f32.mrb[0].mxu0
    %v1580 = vpop.f32.mrb[0].mxu0
    %v1581 = vadd.f32 0.0, %v1580
    %v1582 = vpop.f32.mrb[0].mxu0
    %1583 = vmatprep.mubr.bf16.mxu0 0
    %1584 = vmatmul.mubr.bf16.gmra.mrb[0].mxu0 %v1478
    %v1585 = vpop.f32.mrb[0].mxu0
    %v1586 = vadd.f32 0.0, %v1585
    %v1587 = vpop.f32.mrb[0].mxu0
    %v1588 = vpop.f32.mrb[0].mxu0
    %v1589 = vpop.f32.mrb[0].mxu0
    %1590 = vdwg.mxu0
    %v1591 = vmul.f32 %v1578, 0.03125
    %v1592 = vmul.f32 %v1581, 0.03125
    %v1593 = vmul.f32 %v1586, 0.03125
    %v1594 = vsub.f32 %v1474, %v1591
    %v1595 = vsub.f32 %v1475, %v1592
    %v1596 = vsub.f32 %v1476, %v1593
    %v1597 = vmul.f32 %v1594, %v1594
    %v1598 = vmul.f32 %v1595, %v1595
    %v1599 = vmul.f32 %v1596, %v1596
    %v1600 = vpack.c.bf16 %v1598, %v1597
    %v1601 = vpack.c.bf16 %v1599, %v1599
    %1602 = vmatprep.subr.bf16.mxu0 0
    %1603 = vmatpush1.bf16.msra.mxu0 %v1527
    %1604 = vmatprep.subr.bf16.mxu0 0
    %1605 = vmatpush1.bf16.msra.mxu0 %v1528
    %1606 = vmatprep.subr.bf16.mxu0 0
    %1607 = vmatpush1.bf16.msra.mxu0 %v1529
    %1608 = vmatprep.subr.bf16.mxu0 0
    %1609 = vmatpush1.bf16.msra.mxu0 %v1530
    %1610 = vmatprep.subr.bf16.mxu0 0
    %1611 = vmatpush1.bf16.msra.mxu0 %v1531
    %1612 = vmatprep.subr.bf16.mxu0 0
    %1613 = vmatpush1.bf16.msra.mxu0 %v1532
    %1614 = vmatprep.subr.bf16.mxu0 0
    %1615 = vmatpush1.bf16.msra.mxu0 %v1533
    %1616 = vmatprep.subr.bf16.mxu0 0
    %1617 = vmatpush1.bf16.msra.mxu0 %v1534
    %1618 = vmatprep.subr.bf16.mxu0 0
    %1619 = vmatpush1.bf16.msra.mxu0 0
    %1620 = vmatprep.subr.bf16.mxu0 0
    %1621 = vmatpush1.bf16.msra.mxu0 0
    %1622 = vmatprep.subr.bf16.mxu0 0
    %1623 = vmatpush1.bf16.msra.mxu0 0
    %1624 = vmatprep.subr.bf16.mxu0 0
    %1625 = vmatpush1.bf16.msra.mxu0 0
    %1626 = vmatprep.subr.bf16.mxu0 0
    %1627 = vmatpush1.bf16.msra.mxu0 0
    %1628 = vmatprep.subr.bf16.mxu0 0
    %1629 = vmatpush1.bf16.msra.mxu0 0
    %1630 = vmatprep.subr.bf16.mxu0 0
    %1631 = vmatpush1.bf16.msra.mxu0 0
    %1632 = vmatprep.subr.bf16.mxu0 0
    %1633 = vmatpush1.bf16.msra.mxu0 0
    %1634 = vmatprep.mubr.bf16.mxu0 0
    %1635 = vmatmul.mubr.bf16.gmra.mrb[0].mxu0 %v1600
    %v1636 = vpop.f32.mrb[0].mxu0
    %v1637 = vadd.f32 0.0, %v1636
    %v1638 = vpop.f32.mrb[0].mxu0
    %v1639 = vpop.f32.mrb[0].mxu0
    %v1640 = vadd.f32 0.0, %v1639
    %v1641 = vpop.f32.mrb[0].mxu0
    %1642 = vmatprep.mubr.bf16.mxu0 0
    %1643 = vmatmul.mubr.bf16.gmra.mrb[0].mxu0 %v1601
    %v1644 = vpop.f32.mrb[0].mxu0
    %v1645 = vadd.f32 0.0, %v1644
    %v1646 = vpop.f32.mrb[0].mxu0
    %v1647 = vpop.f32.mrb[0].mxu0
    %v1648 = vpop.f32.mrb[0].mxu0
    %1649 = vdwg.mxu0
    %v1650 = vmul.f32 %v1637, 0.03125
    %v1651 = vmul.f32 %v1640, 0.03125
    %v1652 = vmul.f32 %v1645, 0.03125
    %v1653 = vadd.f32 %v1650, 1e-05
    %v1654 = vadd.f32 %v1651, 1e-05
    %v1655 = vadd.f32 %v1652, 1e-05
    %v1656 = vrsqrt.pop %v1653
    %v1657 = vrsqrt.pop %v1654
    %v1658 = vrsqrt.pop %v1655
    %v1659 = vmul.f32 %v1594, %v1656
    %v1660 = vmul.f32 %v1595, %v1657
    %v1661 = vmul.f32 %v1596, %v1658
    %v1662 = vld [vmem:[#allocation7] sm:$0x1]
    %v1664 = vlaneseq
    %v1665 = vshrl.u32 %v1664, 7
    %v1666 = vsub.s32 0, %v1665
    %v1667 = vrot.slane %v1662, %v1666
    %v1669 = vmul.f32 %v1659, %v1667
    %v1670 = vmul.f32 %v1660, %v1667
    %v1671 = vmul.f32 %v1661, %v1667
    %v1672 = vld [vmem:[%s7] sm:$0x1]
    %v1674 = vlaneseq
    %v1675 = vshrl.u32 %v1674, 7
    %v1676 = vsub.s32 0, %v1675
    %v1677 = vrot.slane %v1672, %v1676
    %v1679 = vadd.f32 %v1669, %v1677
    %v1680 = vadd.f32 %v1670, %v1677
    %v1681 = vadd.f32 %v1671, %v1677
    %v1682 = vmul.f32 %v1679, 0.5
    %v1683 = vmul.f32 %v1680, 0.5
    %v1684 = vmul.f32 %v1681, 0.5
    %v1685 = vmul.f32 %v1679, 0.70710677
    %v1686 = vmul.f32 %v1680, 0.70710677
    %v1687 = vmul.f32 %v1681, 0.70710677
    %v1688 = verf.f32.pop %v1685
    %v1689 = verf.f32.pop %v1686
    %v1690 = verf.f32.pop %v1687
    %v1691 = vadd.f32 %v1688, 1.0
    %v1692 = vadd.f32 %v1689, 1.0
    %v1693 = vadd.f32 %v1690, 1.0
    %v1694 = vmul.f32 %v1682, %v1691
    %v1695 = vmul.f32 %v1683, %v1692
    %v1696 = vmul.f32 %v1684, %v1693
    %v1697 = vpack.c.bf16 %v1695, %v1694
    %v1698 = vpack.c.bf16 %v1696, %v1696
    %v1699 = vld [vmem:[%s9] sm:$0xf]
    %v1700 = vld [vmem:[%s9 + $0x4] sm:$0xf]
    %v1701 = vld [vmem:[%s9 + $0x8] sm:$0xf]
    %v1702 = vld [vmem:[%s9 + $0xc] sm:$0xf]
    %v1703 = vld [vmem:[%s9 + $0x10] sm:$0xf]
    %v1704 = vld [vmem:[%s9 + $0x14] sm:$0xf]
    %v1705 = vld [vmem:[%s9 + $0x18] sm:$0xf]
    %v1706 = vld [vmem:[%s9 + $0x1c] sm:$0xf]
    %v1707 = vld [vmem:[%s9 + $0x20] sm:$0xf]
    %v1708 = vld [vmem:[%s9 + $0x24] sm:$0xf]
    %v1709 = vld [vmem:[%s9 + $0x28] sm:$0xf]
    %v1710 = vld [vmem:[%s9 + $0x2c] sm:$0xf]
    %v1711 = vld [vmem:[%s9 + $0x30] sm:$0xf]
    %v1712 = vld [vmem:[%s9 + $0x34] sm:$0xf]
    %v1713 = vld [vmem:[%s9 + $0x38] sm:$0xf]
    %v1714 = vld [vmem:[%s9 + $0x3c] sm:$0xf]
    %v1715 = vld [vmem:[%s10] sm:$0x1]
    %v1717 = vlaneseq
    %v1718 = vshrl.u32 %v1717, 7
    %v1719 = vsub.s32 0, %v1718
    %v1720 = vrot.slane %v1715, %v1719
    %v1738 = vunpack.c.l.b16 %v1699
    %v1739 = vunpack.c.l.b16 %v1700
    %v1740 = vunpack.c.l.b16 %v1701
    %v1741 = vunpack.c.l.b16 %v1702
    %v1742 = vunpack.c.l.b16 %v1703
    %v1743 = vunpack.c.l.b16 %v1704
    %v1744 = vunpack.c.l.b16 %v1705
    %v1745 = vunpack.c.l.b16 %v1706
    %v1746 = vunpack.c.l.b16 %v1707
    %v1747 = vunpack.c.l.b16 %v1708
    %v1748 = vunpack.c.l.b16 %v1709
    %v1749 = vunpack.c.l.b16 %v1710
    %v1750 = vunpack.c.l.b16 %v1711
    %v1751 = vunpack.c.l.b16 %v1712
    %v1752 = vunpack.c.l.b16 %v1713
    %v1753 = vunpack.c.l.b16 %v1714
    %v1754 = vpack.c.b16 %v1739, %v1738
    %v1755 = vpack.c.b16 %v1741, %v1740
    %v1756 = vpack.c.b16 %v1743, %v1742
    %v1757 = vpack.c.b16 %v1745, %v1744
    %v1758 = vpack.c.b16 %v1747, %v1746
    %v1759 = vpack.c.b16 %v1749, %v1748
    %v1760 = vpack.c.b16 %v1751, %v1750
    %v1761 = vpack.c.b16 %v1753, %v1752
    %1770 = vmatprep.subr.bf16.mxu0 0
    %1771 = vmatpush1.bf16.msra.mxu0 %v1754
    %1772 = vmatprep.subr.bf16.mxu0 0
    %1773 = vmatpush1.bf16.msra.mxu0 %v1755
    %1774 = vmatprep.subr.bf16.mxu0 0
    %1775 = vmatpush1.bf16.msra.mxu0 %v1756
    %1776 = vmatprep.subr.bf16.mxu0 0
    %1777 = vmatpush1.bf16.msra.mxu0 %v1757
    %1778 = vmatprep.subr.bf16.mxu0 0
    %1779 = vmatpush1.bf16.msra.mxu0 %v1758
    %1780 = vmatprep.subr.bf16.mxu0 0
    %1781 = vmatpush1.bf16.msra.mxu0 %v1759
    %1782 = vmatprep.subr.bf16.mxu0 0
    %1783 = vmatpush1.bf16.msra.mxu0 %v1760
    %1784 = vmatprep.subr.bf16.mxu0 0
    %1785 = vmatpush1.bf16.msra.mxu0 %v1761
    %1786 = vmatprep.subr.bf16.mxu0 0
    %1787 = vmatpush1.bf16.msra.mxu0 0
    %1788 = vmatprep.subr.bf16.mxu0 0
    %1789 = vmatpush1.bf16.msra.mxu0 0
    %1790 = vmatprep.subr.bf16.mxu0 0
    %1791 = vmatpush1.bf16.msra.mxu0 0
    %1792 = vmatprep.subr.bf16.mxu0 0
    %1793 = vmatpush1.bf16.msra.mxu0 0
    %1794 = vmatprep.subr.bf16.mxu0 0
    %1795 = vmatpush1.bf16.msra.mxu0 0
    %1796 = vmatprep.subr.bf16.mxu0 0
    %1797 = vmatpush1.bf16.msra.mxu0 0
    %1798 = vmatprep.subr.bf16.mxu0 0
    %1799 = vmatpush1.bf16.msra.mxu0 0
    %1800 = vmatprep.subr.bf16.mxu0 0
    %1801 = vmatpush1.bf16.msra.mxu0 0
    %1802 = vmatprep.mubr.bf16.mxu0 0
    %1803 = vmatmul.mubr.bf16.gmra.mrb[0].mxu0 %v1697
    %v1804 = vpop.f32.mrb[0].mxu0
    %v1805 = vadd.f32 %v1720, %v1804
    %v1806 = vpop.f32.mrb[0].mxu0
    %v1807 = vpop.f32.mrb[0].mxu0
    %v1808 = vadd.f32 %v1720, %v1807
    %v1809 = vpop.f32.mrb[0].mxu0
    %1810 = vmatprep.mubr.bf16.mxu0 0
    %1811 = vmatmul.mubr.bf16.gmra.mrb[0].mxu0 %v1698
    %v1812 = vpop.f32.mrb[0].mxu0
    %v1813 = vadd.f32 %v1720, %v1812
    %v1814 = vpop.f32.mrb[0].mxu0
    %v1815 = vpop.f32.mrb[0].mxu0
    %v1816 = vpop.f32.mrb[0].mxu0
    %1817 = vdwg.mxu0
    %v1818 = vsel %vm1282, %v1805, 0.0
    %1819 = vadd.xlane.f32.xlu0 %v1818
    %v1820 = vpop.xlane.xlu0 %1819
    %v1821 = vsel %vm1282, %v1808, 0.0
    %1822 = vadd.xlane.f32.xlu0 %v1821
    %v1823 = vpop.xlane.xlu0 %1822
    %v1824 = vsel %vm1282, %v1813, 0.0
    %1825 = vadd.xlane.f32.xlu0 %v1824
    %v1826 = vpop.xlane.xlu0 %1825
    %v1827 = vrcp.pop 32.0
    %v1828 = vmul.f32 %v1820, %v1827
    %v1829 = vmul.f32 %v1823, %v1827
    %v1830 = vmul.f32 %v1826, %v1827
    %v1831 = vsub.f32 %v1805, %v1828
    %v1832 = vsub.f32 %v1808, %v1829
    %v1833 = vsub.f32 %v1813, %v1830
    %v1834 = vmul.f32 %v1831, %v1831
    %v1835 = vmul.f32 %v1832, %v1832
    %v1836 = vmul.f32 %v1833, %v1833
    %v1837 = vsel %vm1282, %v1834, 0.0
    %1838 = vadd.xlane.f32.xlu0 %v1837
    %v1839 = vpop.xlane.xlu0 %1838
    %v1840 = vsel %vm1282, %v1835, 0.0
    %1841 = vadd.xlane.f32.xlu0 %v1840
    %v1842 = vpop.xlane.xlu0 %1841
    %v1843 = vsel %vm1282, %v1836, 0.0
    %1844 = vadd.xlane.f32.xlu0 %v1843
    %v1845 = vpop.xlane.xlu0 %1844
    %v1846 = vmul.f32 %v1839, %v1827
    %v1847 = vmul.f32 %v1842, %v1827
    %v1848 = vmul.f32 %v1845, %v1827
    %v1849 = vadd.f32 %v1846, 1e-05
    %v1850 = vadd.f32 %v1847, 1e-05
    %v1851 = vadd.f32 %v1848, 1e-05
    %v1852 = vrsqrt.pop %v1849
    %v1853 = vrsqrt.pop %v1850
    %v1854 = vrsqrt.pop %v1851
    %v1855 = vmul.f32 %v1831, %v1852
    %v1856 = vmul.f32 %v1832, %v1853
    %v1857 = vmul.f32 %v1833, %v1854
    %v1858 = vld [vmem:[%s11] sm:$0x1]
    %v1860 = vlaneseq
    %v1861 = vshrl.u32 %v1860, 7
    %v1862 = vsub.s32 0, %v1861
    %v1863 = vrot.slane %v1858, %v1862
    %v1865 = vmul.f32 %v1855, %v1863
    %v1866 = vmul.f32 %v1856, %v1863
    %v1867 = vmul.f32 %v1857, %v1863
    %v1868 = vld [vmem:[%s12] sm:$0x1]
    %v1870 = vlaneseq
    %v1871 = vshrl.u32 %v1870, 7
    %v1872 = vsub.s32 0, %v1871
    %v1873 = vrot.slane %v1868, %v1872
    %v1875 = vadd.f32 %v1865, %v1873
    %v1876 = vadd.f32 %v1866, %v1873
    %v1877 = vadd.f32 %v1867, %v1873
    %v1878 = vmul.f32 %v1875, 0.5
    %v1879 = vmul.f32 %v1876, 0.5
    %v1880 = vmul.f32 %v1877, 0.5
    %v1881 = vmul.f32 %v1875, 0.70710677
    %v1882 = vmul.f32 %v1876, 0.70710677
    %v1883 = vmul.f32 %v1877, 0.70710677
    %v1884 = verf.f32.pop %v1881
    %v1885 = verf.f32.pop %v1882
    %v1886 = verf.f32.pop %v1883
    %v1887 = vadd.f32 %v1884, 1.0
    %v1888 = vadd.f32 %v1885, 1.0
    %v1889 = vadd.f32 %v1886, 1.0
    %v1890 = vmul.f32 %v1878, %v1887
    %v1891 = vmul.f32 %v1879, %v1888
    %v1892 = vmul.f32 %v1880, %v1889
    %v1893 = vpack.c.bf16 %v1891, %v1890
    %v1894 = vpack.c.bf16 %v1892, %v1892
    %v1895 = vld [vmem:[%s13] sm:$0xf]
    %v1896 = vld [vmem:[%s13 + $0x4] sm:$0xf]
    %v1897 = vld [vmem:[%s13 + $0x8] sm:$0xf]
    %v1898 = vld [vmem:[%s13 + $0xc] sm:$0xf]
    %v1899 = vld [vmem:[%s14] sm:$0x1]
    %v1901 = vlaneseq
    %v1902 = vshrl.u32 %v1901, 7
    %v1903 = vsub.s32 0, %v1902
    %v1904 = vrot.slane %v1899, %v1903
    %v1910 = vunpack.c.l.b16 %v1895
    %v1911 = vunpack.c.l.b16 %v1896
    %v1912 = vunpack.c.l.b16 %v1897
    %v1913 = vunpack.c.l.b16 %v1898
    %v1914 = vpack.c.b16 %v1911, %v1910
    %v1915 = vpack.c.b16 %v1913, %v1912
    %v1919 = vsel %vm1282, %v1893, 0
    %v1922 = vsel %vm1282, %v1894, 0
    %1924 = vmatprep.subr.bf16.mxu0 0
    %1925 = vmatpush1.bf16.msra.mxu0 %v1914
    %1926 = vmatprep.subr.bf16.mxu0 0
    %1927 = vmatpush1.bf16.msra.mxu0 %v1915
    %1928 = vmatprep.subr.bf16.mxu0 0
    %1929 = vmatpush1.bf16.msra.mxu0 0
    %1930 = vmatprep.subr.bf16.mxu0 0
    %1931 = vmatpush1.bf16.msra.mxu0 0
    %1932 = vmatprep.subr.bf16.mxu0 0
    %1933 = vmatpush1.bf16.msra.mxu0 0
    %1934 = vmatprep.subr.bf16.mxu0 0
    %1935 = vmatpush1.bf16.msra.mxu0 0
    %1936 = vmatprep.subr.bf16.mxu0 0
    %1937 = vmatpush1.bf16.msra.mxu0 0
    %1938 = vmatprep.subr.bf16.mxu0 0
    %1939 = vmatpush1.bf16.msra.mxu0 0
    %1940 = vmatprep.subr.bf16.mxu0 0
    %1941 = vmatpush1.bf16.msra.mxu0 0
    %1942 = vmatprep.subr.bf16.mxu0 0
    %1943 = vmatpush1.bf16.msra.mxu0 0
    %1944 = vmatprep.subr.bf16.mxu0 0
    %1945 = vmatpush1.bf16.msra.mxu0 0
    %1946 = vmatprep.subr.bf16.mxu0 0
    %1947 = vmatpush1.bf16.msra.mxu0 0
    %1948 = vmatprep.subr.bf16.mxu0 0
    %1949 = vmatpush1.bf16.msra.mxu0 0
    %1950 = vmatprep.subr.bf16.mxu0 0
    %1951 = vmatpush1.bf16.msra.mxu0 0
    %1952 = vmatprep.subr.bf16.mxu0 0
    %1953 = vmatpush1.bf16.msra.mxu0 0
    %1954 = vmatprep.subr.bf16.mxu0 0
    %1955 = vmatpush1.bf16.msra.mxu0 0
    %1956 = vmatprep.mubr.bf16.mxu0 0
    %1957 = vmatmul.mubr.bf16.gmra.mrb[0].mxu0 %v1919
    %v1958 = vpop.f32.mrb[0].mxu0
    %v1959 = vadd.f32 %v1904, %v1958
    %v1960 = vpop.f32.mrb[0].mxu0
    %v1961 = vpop.f32.mrb[0].mxu0
    %v1962 = vadd.f32 %v1904, %v1961
    %v1963 = vpop.f32.mrb[0].mxu0
    %1964 = vmatprep.mubr.bf16.mxu0 0
    %1965 = vmatmul.mubr.bf16.gmra.mrb[0].mxu0 %v1922
    %v1966 = vpop.f32.mrb[0].mxu0
    %v1967 = vadd.f32 %v1904, %v1966
    %v1968 = vpop.f32.mrb[0].mxu0
    %v1969 = vpop.f32.mrb[0].mxu0
    %v1970 = vpop.f32.mrb[0].mxu0
    %1971 = vdwg.mxu0
    %1972 = vst.msk [vmem:[#allocation8] sm:$0xff] %vm1282, %v1959
    %1973 = vst.msk [vmem:[#allocation8 + $0x8] sm:$0xff] %vm1282, %v1962
    %1974 = vst.msk [vmem:[#allocation8 + $0x10] sm:$0xff] %vm1282, %v1967
    // Predicated region
    $region74: #{tpu_custom_call.1} parent=1 // pred_check
      _
    $region75: #{tpu_custom_call.1} parent=1 // pred_check_branch
      %1976 = sbr.rel (0) target = $region77
    $region76: #{tpu_custom_call.1} parent=1 // pred_region
      %s1978 = ssub.s32 384, 384
      %1979 = vsyncadd [#allocation4], %s1978
      %s1980 = sshll.u32 [#allocation8], 4
      %s1981 = int_to_ptr.vmem [resolvable:$true] %s1980
      %1986 = dma.vmem_to_hbm [thread:$0]  %s1981, 384, %s15, [#allocation4], 128, 128, 8
    $region77: #{tpu_custom_call.1} parent=1 // pred_fallthru
      _
    // Predicated region
    $region78: #{tpu_custom_call.1} parent=1 // pred_check
      _
    $region79: #{tpu_custom_call.1} parent=1 // pred_check_branch
      %1988 = sbr.rel (0) target = $region81
    $region80: #{tpu_custom_call.1} parent=1 // pred_region
      %1989 = dma.done [#allocation4], 384
    $region81: #{tpu_custom_call.1} parent=1 // pred_fallthru
      _
    %1990 = vsyncpa [#allocation3], 1
    %1991 = vsyncpa [#allocation6], 1
    %1992 = vsyncpa [#allocation4], 1

</llo_original>
